<compile_context>
chip_gen: v7x
topology: tpu7x:2x2x1
jax: 0.10.0
libtpu: 0.0.40
codegen_flags: <defaults>
</compile_context>

<pallas_src>
import functools

import jax
import jax.numpy as jnp
from jax.experimental import pallas as pl
from jax.experimental.pallas import tpu as pltpu


def _mha_kernel(x_ref, wqkv_ref, bqkv_ref, wp_ref, bp_ref, o_ref, *, B, T, H):
    """x_ref: (B*T, E). wqkv_ref: (E, 3E) with softmax scale pre-folded into Q block."""
    E = x_ref.shape[-1]
    hs = E // H

    # One wide QKV projection for the whole batch (single MXU push).
    qkv = jnp.dot(x_ref[...], wqkv_ref[...],
                  preferred_element_type=jnp.float32) + bqkv_ref[...]   # (B*T, 3E)

    wp = wp_ref[...]          # (E, E)
    bp = bp_ref[...]          # (1, E)

    # Causal (lower-triangular) mask, shared by all batches / heads.
    row = jax.lax.broadcasted_iota(jnp.int32, (T, T), 0)
    col = jax.lax.broadcasted_iota(jnp.int32, (T, T), 1)
    causal = row >= col
    neg_inf = jnp.float32(-jnp.inf)

    # q @ k^T without materializing k.T (contract the last dims of both operands).
    dn = (((1,), (1,)), ((), ()))

    for b in range(B):                       # B, H are tiny & static -> unrolled
        r0, r1 = b * T, (b + 1) * T
        acc = jnp.zeros((T, E), jnp.float32)
        for h in range(H):
            c = h * hs
            q = qkv[r0:r1, c:c + hs]                     # already pre-scaled
            k = qkv[r0:r1, E + c:E + c + hs]
            v = qkv[r0:r1, 2 * E + c:2 * E + c + hs]

            s = jax.lax.dot_general(q, k, dimension_numbers=dn,
                                    preferred_element_type=jnp.float32)  # (T, T)
            s = jnp.where(causal, s, neg_inf)
            s = jnp.exp(s - jnp.max(s, axis=-1, keepdims=True))
            s = s * pl.reciprocal(jnp.sum(s, axis=-1, keepdims=True), approx=True)
            # TODO(synk): attention-dropout / output-dropout omitted
            #             (deterministic eval-mode forward).

            att = jnp.dot(s, v, preferred_element_type=jnp.float32)      # (T, hs)
            # concat(heads) @ Wp  ==  sum_h att_h @ Wp[h*hs:(h+1)*hs, :]
            acc = acc + jnp.dot(att, wp[c:c + hs, :],
                                preferred_element_type=jnp.float32)

        # NOTE: output last dim is 32 (< 128 lanes) -> masked stores, but the whole
        # output is only 2 KiB; an in-kernel reshape to a lane-dense slab would cost
        # more XLU work than the masked stores it saves at this size.
        o_ref[r0:r1, :] = (acc + bp).astype(o_ref.dtype)


def multi_head_attention(x, params):
    """x: (B, T, E) float32. params: dict of stacked per-head + proj weights."""
    B, T, E = x.shape
    H = params["wq"].shape[0]
    hs = E // H
    scale = E ** (-0.5)   # PyTorch source scales by the FULL embedding dim (not hs).

    # Fuse the H per-head q/k/v projections into one (E, 3E) matmul, folding the
    # softmax scale into the Q weights/bias so it never touches the (T,T) scores.
    def stack_w(w):                                  # (H, E, hs) -> (E, H*hs)
        return jnp.transpose(w, (1, 0, 2)).reshape(E, H * hs)

    def stack_b(b):                                  # (H, 1, hs) -> (1, H*hs)
        return jnp.transpose(b, (1, 0, 2)).reshape(1, H * hs)

    w_qkv = jnp.concatenate(
        [stack_w(params["wq"]) * scale, stack_w(params["wk"]), stack_w(params["wv"])],
        axis=1)                                      # (E, 3E) = (32, 96)
    b_qkv = jnp.concatenate(
        [stack_b(params["bq"]) * scale, stack_b(params["bk"]), stack_b(params["bv"])],
        axis=1)                                      # (1, 3E)

    x2d = x.reshape(B * T, E)
    kernel = functools.partial(_mha_kernel, B=B, T=T, H=H)

    out2d = pl.pallas_call(
        kernel,
        out_shape=jax.ShapeDtypeStruct((B * T, E), x.dtype),
        grid=(1,),                                   # single step: everything in VMEM
        in_specs=[
            pl.BlockSpec((B * T, E), lambda i: (0, 0)),      # x (flattened rows)
            pl.BlockSpec((E, 3 * E), lambda i: (0, 0)),      # fused QKV weights
            pl.BlockSpec((1, 3 * E), lambda i: (0, 0)),      # fused QKV bias
            pl.BlockSpec((E, E), lambda i: (0, 0)),          # proj weight
            pl.BlockSpec((1, E), lambda i: (0, 0)),          # proj bias
        ],
        out_specs=pl.BlockSpec((B * T, E), lambda i: (0, 0)),
        compiler_params=pltpu.CompilerParams(
            dimension_semantics=("arbitrary",)),
    )(x2d, w_qkv, b_qkv, params["wp"], params["bp"])

    return out2d.reshape(B, T, E)


def init_params(key, n_emb, n_head):
    """Deterministic init mimicking nn.Linear (uniform(-1/sqrt(in), 1/sqrt(in)))."""
    hs = n_emb // n_head
    keys = jax.random.split(key, 8)

    def linear(kw, kb, fan_in, fan_out):
        bound = 1.0 / jnp.sqrt(fan_in)
        w = jax.random.uniform(kw, (fan_in, fan_out), jnp.float32, -bound, bound)
        b = jax.random.uniform(kb, (1, fan_out), jnp.float32, -bound, bound)
        return w, b

    def head_stack(kw, kb):
        ws, bs = [], []
        for h in range(n_head):
            w, b = linear(jax.random.fold_in(kw, h), jax.random.fold_in(kb, h),
                          n_emb, hs)
            ws.append(w)
            bs.append(b)
        return jnp.stack(ws, 0), jnp.stack(bs, 0)   # (H, E, hs), (H, 1, hs)

    wq, bq = head_stack(keys[0], keys[1])
    wk, bk = head_stack(keys[2], keys[3])
    wv, bv = head_stack(keys[4], keys[5])
    wp, bp = linear(keys[6], keys[7], n_emb, n_emb)
    return dict(wq=wq, bq=bq, wk=wk, bk=bk, wv=wv, bv=bv, wp=wp, bp=bp)


def reference(x, p):
    """Pure-JAX reference of the PyTorch forward (eval mode)."""
    B, T, E = x.shape
    H = p["wq"].shape[0]
    row = jnp.arange(T)[:, None]
    col = jnp.arange(T)[None, :]
    causal = row >= col
    outs = []
    for h in range(H):
        q = x @ p["wq"][h] + p["bq"][h]
        k = x @ p["wk"][h] + p["bk"][h]
        v = x @ p["wv"][h] + p["bv"][h]
        w = jnp.einsum("btd,bsd->bts", q, k) * E ** (-0.5)
        w = jnp.where(causal[None], w, -jnp.inf)
        w = jax.nn.softmax(w, axis=-1)
        outs.append(jnp.einsum("bts,bsd->btd", w, v))
    cat = jnp.concatenate(outs, axis=-1)
    return cat @ p["wp"] + p["bp"]


if __name__ == "__main__":
    n_emb, n_head = 32, 4          # GPTConfig: n_emb = 4*8, n_head = 4
    B, T = 2, 8                    # small seq <= block_size (128)

    key = jax.random.PRNGKey(0)
    kx, kp = jax.random.split(key)
    x = jax.random.normal(kx, (B, T, n_emb), jnp.float32)
    params = init_params(kp, n_emb, n_head)

    out = multi_head_attention(x, params)
    out = jax.block_until_ready(out)

    ref = reference(x, params)
    assert out.shape == (B, T, n_emb)
    # approx-reciprocal softmax denominator contributes ~1e-4-level relative error,
    # so the check tolerance is relaxed slightly vs a pure-f32 comparison.
    assert jnp.allclose(out, ref, atol=1e-3, rtol=1e-3), "mismatch vs JAX reference"
    print("KERNEL_OK")
</pallas_src>

<mosaic_0001>
module attributes {stable_mosaic.version = 11 : i64} {
  func.func @_mha_kernel(%arg0: i32, %arg1: memref<16x32xf32, #tpu.memory_space<vmem>>, %arg2: memref<32x96xf32, #tpu.memory_space<vmem>>, %arg3: memref<1x96xf32, #tpu.memory_space<vmem>>, %arg4: memref<32x32xf32, #tpu.memory_space<vmem>>, %arg5: memref<1x32xf32, #tpu.memory_space<vmem>>, %arg6: memref<16x32xf32, #tpu.memory_space<vmem>>) attributes {dimension_semantics = [#tpu.dimension_semantics<arbitrary>], iteration_bounds = array<i64: 1>, scalar_prefetch = 0 : i64, scratch_operands = 0 : i64, tpu.core_type = #tpu.core_type<tc>, window_params = [{pipeline_mode = #tpu.pipeline_mode<synchronous>, transform_indices = @transform_0, window_bounds = array<i64: 16, 32>}, {pipeline_mode = #tpu.pipeline_mode<synchronous>, transform_indices = @transform_1, window_bounds = array<i64: 32, 96>}, {pipeline_mode = #tpu.pipeline_mode<synchronous>, transform_indices = @transform_2, window_bounds = array<i64: 1, 96>}, {pipeline_mode = #tpu.pipeline_mode<synchronous>, transform_indices = @transform_3, window_bounds = array<i64: 32, 32>}, {pipeline_mode = #tpu.pipeline_mode<synchronous>, transform_indices = @transform_4, window_bounds = array<i64: 1, 32>}, {pipeline_mode = #tpu.pipeline_mode<synchronous>, transform_indices = @transform_5, window_bounds = array<i64: 16, 32>}]} {
    %c0 = arith.constant 0 : index
    %c0_0 = arith.constant 0 : index
    %0 = vector.load %arg1[%c0, %c0_0] : memref<16x32xf32, #tpu.memory_space<vmem>>, vector<16x32xf32>
    %c0_1 = arith.constant 0 : index
    %c0_2 = arith.constant 0 : index
    %1 = vector.load %arg2[%c0_1, %c0_2] : memref<32x96xf32, #tpu.memory_space<vmem>>, vector<32x96xf32>
    %cst = arith.constant dense<0.000000e+00> : vector<16x96xf32>
    %2 = tpu.matmul %0, %1, %cst {dimension_numbers = #tpu.dot_dimension_numbers<[1], [0], [0], [1], [0, 0, 1, 1], [], []>} : vector<16x32xf32>, vector<32x96xf32>, vector<16x96xf32> -> vector<16x96xf32>
    %c0_3 = arith.constant 0 : index
    %c0_4 = arith.constant 0 : index
    %3 = vector.load %arg3[%c0_3, %c0_4] : memref<1x96xf32, #tpu.memory_space<vmem>>, vector<1x96xf32>
    %4 = vector.broadcast %3 : vector<1x96xf32> to vector<16x96xf32>
    %5 = arith.addf %2, %4 : vector<16x96xf32>
    %c0_5 = arith.constant 0 : index
    %c0_6 = arith.constant 0 : index
    %6 = vector.load %arg4[%c0_5, %c0_6] : memref<32x32xf32, #tpu.memory_space<vmem>>, vector<32x32xf32>
    %c0_7 = arith.constant 0 : index
    %c0_8 = arith.constant 0 : index
    %7 = vector.load %arg5[%c0_7, %c0_8] : memref<1x32xf32, #tpu.memory_space<vmem>>, vector<1x32xf32>
    %8 = tpu.iota {dimensions = array<i32: 0>} : vector<8x8xi32>
    %9 = tpu.iota {dimensions = array<i32: 1>} : vector<8x8xi32>
    %10 = arith.cmpi sge, %8, %9 : vector<8x8xi32>
    %cst_9 = arith.constant 0.000000e+00 : f32
    %11 = vector.broadcast %cst_9 : f32 to vector<8x32xf32>
    %12 = vector.extract_strided_slice %5 {offsets = [0, 0], sizes = [8, 8], strides = [1, 1]} : vector<16x96xf32> to vector<8x8xf32>
    %13 = vector.extract_strided_slice %5 {offsets = [0, 32], sizes = [8, 8], strides = [1, 1]} : vector<16x96xf32> to vector<8x8xf32>
    %14 = vector.extract_strided_slice %5 {offsets = [0, 64], sizes = [8, 8], strides = [1, 1]} : vector<16x96xf32> to vector<8x8xf32>
    %cst_10 = arith.constant dense<0.000000e+00> : vector<8x8xf32>
    %15 = tpu.matmul %12, %13, %cst_10 {dimension_numbers = #tpu.dot_dimension_numbers<[1], [1], [0], [0], [0, 0, 1, 0], [], []>} : vector<8x8xf32>, vector<8x8xf32>, vector<8x8xf32> -> vector<8x8xf32>
    %cst_11 = arith.constant 0xFF800000 : f32
    %16 = vector.broadcast %cst_11 : f32 to vector<8x8xf32>
    %17 = arith.select %10, %15, %16 : vector<8x8xi1>, vector<8x8xf32>
    %cst_12 = arith.constant dense<0xFF800000> : vector<8xf32>
    %18 = vector.multi_reduction <maximumf>, %17, %cst_12 [1] : vector<8x8xf32> to vector<8xf32>
    %19 = vector.shape_cast %18 : vector<8xf32> to vector<8x1xf32>
    %20 = vector.broadcast %19 : vector<8x1xf32> to vector<8x8xf32>
    %21 = arith.subf %17, %20 : vector<8x8xf32>
    %22 = math.exp %21 : vector<8x8xf32>
    %cst_13 = arith.constant dense<0.000000e+00> : vector<8xf32>
    %23 = vector.multi_reduction <add>, %22, %cst_13 [1] : vector<8x8xf32> to vector<8xf32>
    %24 = vector.shape_cast %23 : vector<8xf32> to vector<8x1xf32>
    %25 = tpu.reciprocal %24 {approx = true} : vector<8x1xf32> -> vector<8x1xf32>
    %26 = vector.broadcast %25 : vector<8x1xf32> to vector<8x8xf32>
    %27 = arith.mulf %22, %26 : vector<8x8xf32>
    %cst_14 = arith.constant dense<0.000000e+00> : vector<8x8xf32>
    %28 = tpu.matmul %27, %14, %cst_14 {dimension_numbers = #tpu.dot_dimension_numbers<[1], [0], [0], [1], [0, 0, 1, 1], [], []>} : vector<8x8xf32>, vector<8x8xf32>, vector<8x8xf32> -> vector<8x8xf32>
    %29 = vector.extract_strided_slice %6 {offsets = [0, 0], sizes = [8, 32], strides = [1, 1]} : vector<32x32xf32> to vector<8x32xf32>
    %cst_15 = arith.constant dense<0.000000e+00> : vector<8x32xf32>
    %30 = tpu.matmul %28, %29, %cst_15 {dimension_numbers = #tpu.dot_dimension_numbers<[1], [0], [0], [1], [0, 0, 1, 1], [], []>} : vector<8x8xf32>, vector<8x32xf32>, vector<8x32xf32> -> vector<8x32xf32>
    %31 = arith.addf %11, %30 : vector<8x32xf32>
    %32 = vector.extract_strided_slice %5 {offsets = [0, 8], sizes = [8, 8], strides = [1, 1]} : vector<16x96xf32> to vector<8x8xf32>
    %33 = vector.extract_strided_slice %5 {offsets = [0, 40], sizes = [8, 8], strides = [1, 1]} : vector<16x96xf32> to vector<8x8xf32>
    %34 = vector.extract_strided_slice %5 {offsets = [0, 72], sizes = [8, 8], strides = [1, 1]} : vector<16x96xf32> to vector<8x8xf32>
    %cst_16 = arith.constant dense<0.000000e+00> : vector<8x8xf32>
    %35 = tpu.matmul %32, %33, %cst_16 {dimension_numbers = #tpu.dot_dimension_numbers<[1], [1], [0], [0], [0, 0, 1, 0], [], []>} : vector<8x8xf32>, vector<8x8xf32>, vector<8x8xf32> -> vector<8x8xf32>
    %cst_17 = arith.constant 0xFF800000 : f32
    %36 = vector.broadcast %cst_17 : f32 to vector<8x8xf32>
    %37 = arith.select %10, %35, %36 : vector<8x8xi1>, vector<8x8xf32>
    %cst_18 = arith.constant dense<0xFF800000> : vector<8xf32>
    %38 = vector.multi_reduction <maximumf>, %37, %cst_18 [1] : vector<8x8xf32> to vector<8xf32>
    %39 = vector.shape_cast %38 : vector<8xf32> to vector<8x1xf32>
    %40 = vector.broadcast %39 : vector<8x1xf32> to vector<8x8xf32>
    %41 = arith.subf %37, %40 : vector<8x8xf32>
    %42 = math.exp %41 : vector<8x8xf32>
    %cst_19 = arith.constant dense<0.000000e+00> : vector<8xf32>
    %43 = vector.multi_reduction <add>, %42, %cst_19 [1] : vector<8x8xf32> to vector<8xf32>
    %44 = vector.shape_cast %43 : vector<8xf32> to vector<8x1xf32>
    %45 = tpu.reciprocal %44 {approx = true} : vector<8x1xf32> -> vector<8x1xf32>
    %46 = vector.broadcast %45 : vector<8x1xf32> to vector<8x8xf32>
    %47 = arith.mulf %42, %46 : vector<8x8xf32>
    %cst_20 = arith.constant dense<0.000000e+00> : vector<8x8xf32>
    %48 = tpu.matmul %47, %34, %cst_20 {dimension_numbers = #tpu.dot_dimension_numbers<[1], [0], [0], [1], [0, 0, 1, 1], [], []>} : vector<8x8xf32>, vector<8x8xf32>, vector<8x8xf32> -> vector<8x8xf32>
    %49 = vector.extract_strided_slice %6 {offsets = [8, 0], sizes = [8, 32], strides = [1, 1]} : vector<32x32xf32> to vector<8x32xf32>
    %cst_21 = arith.constant dense<0.000000e+00> : vector<8x32xf32>
    %50 = tpu.matmul %48, %49, %cst_21 {dimension_numbers = #tpu.dot_dimension_numbers<[1], [0], [0], [1], [0, 0, 1, 1], [], []>} : vector<8x8xf32>, vector<8x32xf32>, vector<8x32xf32> -> vector<8x32xf32>
    %51 = arith.addf %31, %50 : vector<8x32xf32>
    %52 = vector.extract_strided_slice %5 {offsets = [0, 16], sizes = [8, 8], strides = [1, 1]} : vector<16x96xf32> to vector<8x8xf32>
    %53 = vector.extract_strided_slice %5 {offsets = [0, 48], sizes = [8, 8], strides = [1, 1]} : vector<16x96xf32> to vector<8x8xf32>
    %54 = vector.extract_strided_slice %5 {offsets = [0, 80], sizes = [8, 8], strides = [1, 1]} : vector<16x96xf32> to vector<8x8xf32>
    %cst_22 = arith.constant dense<0.000000e+00> : vector<8x8xf32>
    %55 = tpu.matmul %52, %53, %cst_22 {dimension_numbers = #tpu.dot_dimension_numbers<[1], [1], [0], [0], [0, 0, 1, 0], [], []>} : vector<8x8xf32>, vector<8x8xf32>, vector<8x8xf32> -> vector<8x8xf32>
    %cst_23 = arith.constant 0xFF800000 : f32
    %56 = vector.broadcast %cst_23 : f32 to vector<8x8xf32>
    %57 = arith.select %10, %55, %56 : vector<8x8xi1>, vector<8x8xf32>
    %cst_24 = arith.constant dense<0xFF800000> : vector<8xf32>
    %58 = vector.multi_reduction <maximumf>, %57, %cst_24 [1] : vector<8x8xf32> to vector<8xf32>
    %59 = vector.shape_cast %58 : vector<8xf32> to vector<8x1xf32>
    %60 = vector.broadcast %59 : vector<8x1xf32> to vector<8x8xf32>
    %61 = arith.subf %57, %60 : vector<8x8xf32>
    %62 = math.exp %61 : vector<8x8xf32>
    %cst_25 = arith.constant dense<0.000000e+00> : vector<8xf32>
    %63 = vector.multi_reduction <add>, %62, %cst_25 [1] : vector<8x8xf32> to vector<8xf32>
    %64 = vector.shape_cast %63 : vector<8xf32> to vector<8x1xf32>
    %65 = tpu.reciprocal %64 {approx = true} : vector<8x1xf32> -> vector<8x1xf32>
    %66 = vector.broadcast %65 : vector<8x1xf32> to vector<8x8xf32>
    %67 = arith.mulf %62, %66 : vector<8x8xf32>
    %cst_26 = arith.constant dense<0.000000e+00> : vector<8x8xf32>
    %68 = tpu.matmul %67, %54, %cst_26 {dimension_numbers = #tpu.dot_dimension_numbers<[1], [0], [0], [1], [0, 0, 1, 1], [], []>} : vector<8x8xf32>, vector<8x8xf32>, vector<8x8xf32> -> vector<8x8xf32>
    %69 = vector.extract_strided_slice %6 {offsets = [16, 0], sizes = [8, 32], strides = [1, 1]} : vector<32x32xf32> to vector<8x32xf32>
    %cst_27 = arith.constant dense<0.000000e+00> : vector<8x32xf32>
    %70 = tpu.matmul %68, %69, %cst_27 {dimension_numbers = #tpu.dot_dimension_numbers<[1], [0], [0], [1], [0, 0, 1, 1], [], []>} : vector<8x8xf32>, vector<8x32xf32>, vector<8x32xf32> -> vector<8x32xf32>
    %71 = arith.addf %51, %70 : vector<8x32xf32>
    %72 = vector.extract_strided_slice %5 {offsets = [0, 24], sizes = [8, 8], strides = [1, 1]} : vector<16x96xf32> to vector<8x8xf32>
    %73 = vector.extract_strided_slice %5 {offsets = [0, 56], sizes = [8, 8], strides = [1, 1]} : vector<16x96xf32> to vector<8x8xf32>
    %74 = vector.extract_strided_slice %5 {offsets = [0, 88], sizes = [8, 8], strides = [1, 1]} : vector<16x96xf32> to vector<8x8xf32>
    %cst_28 = arith.constant dense<0.000000e+00> : vector<8x8xf32>
    %75 = tpu.matmul %72, %73, %cst_28 {dimension_numbers = #tpu.dot_dimension_numbers<[1], [1], [0], [0], [0, 0, 1, 0], [], []>} : vector<8x8xf32>, vector<8x8xf32>, vector<8x8xf32> -> vector<8x8xf32>
    %cst_29 = arith.constant 0xFF800000 : f32
    %76 = vector.broadcast %cst_29 : f32 to vector<8x8xf32>
    %77 = arith.select %10, %75, %76 : vector<8x8xi1>, vector<8x8xf32>
    %cst_30 = arith.constant dense<0xFF800000> : vector<8xf32>
    %78 = vector.multi_reduction <maximumf>, %77, %cst_30 [1] : vector<8x8xf32> to vector<8xf32>
    %79 = vector.shape_cast %78 : vector<8xf32> to vector<8x1xf32>
    %80 = vector.broadcast %79 : vector<8x1xf32> to vector<8x8xf32>
    %81 = arith.subf %77, %80 : vector<8x8xf32>
    %82 = math.exp %81 : vector<8x8xf32>
    %cst_31 = arith.constant dense<0.000000e+00> : vector<8xf32>
    %83 = vector.multi_reduction <add>, %82, %cst_31 [1] : vector<8x8xf32> to vector<8xf32>
    %84 = vector.shape_cast %83 : vector<8xf32> to vector<8x1xf32>
    %85 = tpu.reciprocal %84 {approx = true} : vector<8x1xf32> -> vector<8x1xf32>
    %86 = vector.broadcast %85 : vector<8x1xf32> to vector<8x8xf32>
    %87 = arith.mulf %82, %86 : vector<8x8xf32>
    %cst_32 = arith.constant dense<0.000000e+00> : vector<8x8xf32>
    %88 = tpu.matmul %87, %74, %cst_32 {dimension_numbers = #tpu.dot_dimension_numbers<[1], [0], [0], [1], [0, 0, 1, 1], [], []>} : vector<8x8xf32>, vector<8x8xf32>, vector<8x8xf32> -> vector<8x8xf32>
    %89 = vector.extract_strided_slice %6 {offsets = [24, 0], sizes = [8, 32], strides = [1, 1]} : vector<32x32xf32> to vector<8x32xf32>
    %cst_33 = arith.constant dense<0.000000e+00> : vector<8x32xf32>
    %90 = tpu.matmul %88, %89, %cst_33 {dimension_numbers = #tpu.dot_dimension_numbers<[1], [0], [0], [1], [0, 0, 1, 1], [], []>} : vector<8x8xf32>, vector<8x32xf32>, vector<8x32xf32> -> vector<8x32xf32>
    %91 = arith.addf %71, %90 : vector<8x32xf32>
    %92 = vector.broadcast %7 : vector<1x32xf32> to vector<8x32xf32>
    %93 = arith.addf %91, %92 : vector<8x32xf32>
    %c0_34 = arith.constant 0 : index
    %c0_35 = arith.constant 0 : index
    %94 = vector.load %arg6[%c0_34, %c0_35] : memref<16x32xf32, #tpu.memory_space<vmem>>, vector<8x32xf32>
    tpu.vector_store %arg6[%c0_34, %c0_35], %93 {strides = array<i32>} : memref<16x32xf32, #tpu.memory_space<vmem>>, vector<8x32xf32>,
    %cst_36 = arith.constant 0.000000e+00 : f32
    %95 = vector.broadcast %cst_36 : f32 to vector<8x32xf32>
    %96 = vector.extract_strided_slice %5 {offsets = [8, 0], sizes = [8, 8], strides = [1, 1]} : vector<16x96xf32> to vector<8x8xf32>
    %97 = vector.extract_strided_slice %5 {offsets = [8, 32], sizes = [8, 8], strides = [1, 1]} : vector<16x96xf32> to vector<8x8xf32>
    %98 = vector.extract_strided_slice %5 {offsets = [8, 64], sizes = [8, 8], strides = [1, 1]} : vector<16x96xf32> to vector<8x8xf32>
    %cst_37 = arith.constant dense<0.000000e+00> : vector<8x8xf32>
    %99 = tpu.matmul %96, %97, %cst_37 {dimension_numbers = #tpu.dot_dimension_numbers<[1], [1], [0], [0], [0, 0, 1, 0], [], []>} : vector<8x8xf32>, vector<8x8xf32>, vector<8x8xf32> -> vector<8x8xf32>
    %cst_38 = arith.constant 0xFF800000 : f32
    %100 = vector.broadcast %cst_38 : f32 to vector<8x8xf32>
    %101 = arith.select %10, %99, %100 : vector<8x8xi1>, vector<8x8xf32>
    %cst_39 = arith.constant dense<0xFF800000> : vector<8xf32>
    %102 = vector.multi_reduction <maximumf>, %101, %cst_39 [1] : vector<8x8xf32> to vector<8xf32>
    %103 = vector.shape_cast %102 : vector<8xf32> to vector<8x1xf32>
    %104 = vector.broadcast %103 : vector<8x1xf32> to vector<8x8xf32>
    %105 = arith.subf %101, %104 : vector<8x8xf32>
    %106 = math.exp %105 : vector<8x8xf32>
    %cst_40 = arith.constant dense<0.000000e+00> : vector<8xf32>
    %107 = vector.multi_reduction <add>, %106, %cst_40 [1] : vector<8x8xf32> to vector<8xf32>
    %108 = vector.shape_cast %107 : vector<8xf32> to vector<8x1xf32>
    %109 = tpu.reciprocal %108 {approx = true} : vector<8x1xf32> -> vector<8x1xf32>
    %110 = vector.broadcast %109 : vector<8x1xf32> to vector<8x8xf32>
    %111 = arith.mulf %106, %110 : vector<8x8xf32>
    %cst_41 = arith.constant dense<0.000000e+00> : vector<8x8xf32>
    %112 = tpu.matmul %111, %98, %cst_41 {dimension_numbers = #tpu.dot_dimension_numbers<[1], [0], [0], [1], [0, 0, 1, 1], [], []>} : vector<8x8xf32>, vector<8x8xf32>, vector<8x8xf32> -> vector<8x8xf32>
    %113 = vector.extract_strided_slice %6 {offsets = [0, 0], sizes = [8, 32], strides = [1, 1]} : vector<32x32xf32> to vector<8x32xf32>
    %cst_42 = arith.constant dense<0.000000e+00> : vector<8x32xf32>
    %114 = tpu.matmul %112, %113, %cst_42 {dimension_numbers = #tpu.dot_dimension_numbers<[1], [0], [0], [1], [0, 0, 1, 1], [], []>} : vector<8x8xf32>, vector<8x32xf32>, vector<8x32xf32> -> vector<8x32xf32>
    %115 = arith.addf %95, %114 : vector<8x32xf32>
    %116 = vector.extract_strided_slice %5 {offsets = [8, 8], sizes = [8, 8], strides = [1, 1]} : vector<16x96xf32> to vector<8x8xf32>
    %117 = vector.extract_strided_slice %5 {offsets = [8, 40], sizes = [8, 8], strides = [1, 1]} : vector<16x96xf32> to vector<8x8xf32>
    %118 = vector.extract_strided_slice %5 {offsets = [8, 72], sizes = [8, 8], strides = [1, 1]} : vector<16x96xf32> to vector<8x8xf32>
    %cst_43 = arith.constant dense<0.000000e+00> : vector<8x8xf32>
    %119 = tpu.matmul %116, %117, %cst_43 {dimension_numbers = #tpu.dot_dimension_numbers<[1], [1], [0], [0], [0, 0, 1, 0], [], []>} : vector<8x8xf32>, vector<8x8xf32>, vector<8x8xf32> -> vector<8x8xf32>
    %cst_44 = arith.constant 0xFF800000 : f32
    %120 = vector.broadcast %cst_44 : f32 to vector<8x8xf32>
    %121 = arith.select %10, %119, %120 : vector<8x8xi1>, vector<8x8xf32>
    %cst_45 = arith.constant dense<0xFF800000> : vector<8xf32>
    %122 = vector.multi_reduction <maximumf>, %121, %cst_45 [1] : vector<8x8xf32> to vector<8xf32>
    %123 = vector.shape_cast %122 : vector<8xf32> to vector<8x1xf32>
    %124 = vector.broadcast %123 : vector<8x1xf32> to vector<8x8xf32>
    %125 = arith.subf %121, %124 : vector<8x8xf32>
    %126 = math.exp %125 : vector<8x8xf32>
    %cst_46 = arith.constant dense<0.000000e+00> : vector<8xf32>
    %127 = vector.multi_reduction <add>, %126, %cst_46 [1] : vector<8x8xf32> to vector<8xf32>
    %128 = vector.shape_cast %127 : vector<8xf32> to vector<8x1xf32>
    %129 = tpu.reciprocal %128 {approx = true} : vector<8x1xf32> -> vector<8x1xf32>
    %130 = vector.broadcast %129 : vector<8x1xf32> to vector<8x8xf32>
    %131 = arith.mulf %126, %130 : vector<8x8xf32>
    %cst_47 = arith.constant dense<0.000000e+00> : vector<8x8xf32>
    %132 = tpu.matmul %131, %118, %cst_47 {dimension_numbers = #tpu.dot_dimension_numbers<[1], [0], [0], [1], [0, 0, 1, 1], [], []>} : vector<8x8xf32>, vector<8x8xf32>, vector<8x8xf32> -> vector<8x8xf32>
    %133 = vector.extract_strided_slice %6 {offsets = [8, 0], sizes = [8, 32], strides = [1, 1]} : vector<32x32xf32> to vector<8x32xf32>
    %cst_48 = arith.constant dense<0.000000e+00> : vector<8x32xf32>
    %134 = tpu.matmul %132, %133, %cst_48 {dimension_numbers = #tpu.dot_dimension_numbers<[1], [0], [0], [1], [0, 0, 1, 1], [], []>} : vector<8x8xf32>, vector<8x32xf32>, vector<8x32xf32> -> vector<8x32xf32>
    %135 = arith.addf %115, %134 : vector<8x32xf32>
    %136 = vector.extract_strided_slice %5 {offsets = [8, 16], sizes = [8, 8], strides = [1, 1]} : vector<16x96xf32> to vector<8x8xf32>
    %137 = vector.extract_strided_slice %5 {offsets = [8, 48], sizes = [8, 8], strides = [1, 1]} : vector<16x96xf32> to vector<8x8xf32>
    %138 = vector.extract_strided_slice %5 {offsets = [8, 80], sizes = [8, 8], strides = [1, 1]} : vector<16x96xf32> to vector<8x8xf32>
    %cst_49 = arith.constant dense<0.000000e+00> : vector<8x8xf32>
    %139 = tpu.matmul %136, %137, %cst_49 {dimension_numbers = #tpu.dot_dimension_numbers<[1], [1], [0], [0], [0, 0, 1, 0], [], []>} : vector<8x8xf32>, vector<8x8xf32>, vector<8x8xf32> -> vector<8x8xf32>
    %cst_50 = arith.constant 0xFF800000 : f32
    %140 = vector.broadcast %cst_50 : f32 to vector<8x8xf32>
    %141 = arith.select %10, %139, %140 : vector<8x8xi1>, vector<8x8xf32>
    %cst_51 = arith.constant dense<0xFF800000> : vector<8xf32>
    %142 = vector.multi_reduction <maximumf>, %141, %cst_51 [1] : vector<8x8xf32> to vector<8xf32>
    %143 = vector.shape_cast %142 : vector<8xf32> to vector<8x1xf32>
    %144 = vector.broadcast %143 : vector<8x1xf32> to vector<8x8xf32>
    %145 = arith.subf %141, %144 : vector<8x8xf32>
    %146 = math.exp %145 : vector<8x8xf32>
    %cst_52 = arith.constant dense<0.000000e+00> : vector<8xf32>
    %147 = vector.multi_reduction <add>, %146, %cst_52 [1] : vector<8x8xf32> to vector<8xf32>
    %148 = vector.shape_cast %147 : vector<8xf32> to vector<8x1xf32>
    %149 = tpu.reciprocal %148 {approx = true} : vector<8x1xf32> -> vector<8x1xf32>
    %150 = vector.broadcast %149 : vector<8x1xf32> to vector<8x8xf32>
    %151 = arith.mulf %146, %150 : vector<8x8xf32>
    %cst_53 = arith.constant dense<0.000000e+00> : vector<8x8xf32>
    %152 = tpu.matmul %151, %138, %cst_53 {dimension_numbers = #tpu.dot_dimension_numbers<[1], [0], [0], [1], [0, 0, 1, 1], [], []>} : vector<8x8xf32>, vector<8x8xf32>, vector<8x8xf32> -> vector<8x8xf32>
    %153 = vector.extract_strided_slice %6 {offsets = [16, 0], sizes = [8, 32], strides = [1, 1]} : vector<32x32xf32> to vector<8x32xf32>
    %cst_54 = arith.constant dense<0.000000e+00> : vector<8x32xf32>
    %154 = tpu.matmul %152, %153, %cst_54 {dimension_numbers = #tpu.dot_dimension_numbers<[1], [0], [0], [1], [0, 0, 1, 1], [], []>} : vector<8x8xf32>, vector<8x32xf32>, vector<8x32xf32> -> vector<8x32xf32>
    %155 = arith.addf %135, %154 : vector<8x32xf32>
    %156 = vector.extract_strided_slice %5 {offsets = [8, 24], sizes = [8, 8], strides = [1, 1]} : vector<16x96xf32> to vector<8x8xf32>
    %157 = vector.extract_strided_slice %5 {offsets = [8, 56], sizes = [8, 8], strides = [1, 1]} : vector<16x96xf32> to vector<8x8xf32>
    %158 = vector.extract_strided_slice %5 {offsets = [8, 88], sizes = [8, 8], strides = [1, 1]} : vector<16x96xf32> to vector<8x8xf32>
    %cst_55 = arith.constant dense<0.000000e+00> : vector<8x8xf32>
    %159 = tpu.matmul %156, %157, %cst_55 {dimension_numbers = #tpu.dot_dimension_numbers<[1], [1], [0], [0], [0, 0, 1, 0], [], []>} : vector<8x8xf32>, vector<8x8xf32>, vector<8x8xf32> -> vector<8x8xf32>
    %cst_56 = arith.constant 0xFF800000 : f32
    %160 = vector.broadcast %cst_56 : f32 to vector<8x8xf32>
    %161 = arith.select %10, %159, %160 : vector<8x8xi1>, vector<8x8xf32>
    %cst_57 = arith.constant dense<0xFF800000> : vector<8xf32>
    %162 = vector.multi_reduction <maximumf>, %161, %cst_57 [1] : vector<8x8xf32> to vector<8xf32>
    %163 = vector.shape_cast %162 : vector<8xf32> to vector<8x1xf32>
    %164 = vector.broadcast %163 : vector<8x1xf32> to vector<8x8xf32>
    %165 = arith.subf %161, %164 : vector<8x8xf32>
    %166 = math.exp %165 : vector<8x8xf32>
    %cst_58 = arith.constant dense<0.000000e+00> : vector<8xf32>
    %167 = vector.multi_reduction <add>, %166, %cst_58 [1] : vector<8x8xf32> to vector<8xf32>
    %168 = vector.shape_cast %167 : vector<8xf32> to vector<8x1xf32>
    %169 = tpu.reciprocal %168 {approx = true} : vector<8x1xf32> -> vector<8x1xf32>
    %170 = vector.broadcast %169 : vector<8x1xf32> to vector<8x8xf32>
    %171 = arith.mulf %166, %170 : vector<8x8xf32>
    %cst_59 = arith.constant dense<0.000000e+00> : vector<8x8xf32>
    %172 = tpu.matmul %171, %158, %cst_59 {dimension_numbers = #tpu.dot_dimension_numbers<[1], [0], [0], [1], [0, 0, 1, 1], [], []>} : vector<8x8xf32>, vector<8x8xf32>, vector<8x8xf32> -> vector<8x8xf32>
    %173 = vector.extract_strided_slice %6 {offsets = [24, 0], sizes = [8, 32], strides = [1, 1]} : vector<32x32xf32> to vector<8x32xf32>
    %cst_60 = arith.constant dense<0.000000e+00> : vector<8x32xf32>
    %174 = tpu.matmul %172, %173, %cst_60 {dimension_numbers = #tpu.dot_dimension_numbers<[1], [0], [0], [1], [0, 0, 1, 1], [], []>} : vector<8x8xf32>, vector<8x32xf32>, vector<8x32xf32> -> vector<8x32xf32>
    %175 = arith.addf %155, %174 : vector<8x32xf32>
    %176 = vector.broadcast %7 : vector<1x32xf32> to vector<8x32xf32>
    %177 = arith.addf %175, %176 : vector<8x32xf32>
    %c8 = arith.constant 8 : index
    %c0_61 = arith.constant 0 : index
    %178 = vector.load %arg6[%c8, %c0_61] : memref<16x32xf32, #tpu.memory_space<vmem>>, vector<8x32xf32>
    tpu.vector_store %arg6[%c8, %c0_61], %177 {strides = array<i32>} : memref<16x32xf32, #tpu.memory_space<vmem>>, vector<8x32xf32>,
    return
  }
  func.func @transform_0(%arg0: i32) -> (i32, i32) {
    %c0_i32 = arith.constant 0 : i32
    %c0_i32_0 = arith.constant 0 : i32
    %c0_i32_1 = arith.constant 0 : i32
    return %c0_i32, %c0_i32_0 : i32, i32
  }
  func.func @transform_1(%arg0: i32) -> (i32, i32) {
    %c0_i32 = arith.constant 0 : i32
    %c0_i32_0 = arith.constant 0 : i32
    %c0_i32_1 = arith.constant 0 : i32
    return %c0_i32, %c0_i32_0 : i32, i32
  }
  func.func @transform_2(%arg0: i32) -> (i32, i32) {
    %c0_i32 = arith.constant 0 : i32
    %c0_i32_0 = arith.constant 0 : i32
    %c0_i32_1 = arith.constant 0 : i32
    return %c0_i32, %c0_i32_0 : i32, i32
  }
  func.func @transform_3(%arg0: i32) -> (i32, i32) {
    %c0_i32 = arith.constant 0 : i32
    %c0_i32_0 = arith.constant 0 : i32
    %c0_i32_1 = arith.constant 0 : i32
    return %c0_i32, %c0_i32_0 : i32, i32
  }
  func.func @transform_4(%arg0: i32) -> (i32, i32) {
    %c0_i32 = arith.constant 0 : i32
    %c0_i32_0 = arith.constant 0 : i32
    %c0_i32_1 = arith.constant 0 : i32
    return %c0_i32, %c0_i32_0 : i32, i32
  }
  func.func @transform_5(%arg0: i32) -> (i32, i32) {
    %c0_i32 = arith.constant 0 : i32
    %c0_i32_0 = arith.constant 0 : i32
    %c0_i32_1 = arith.constant 0 : i32
    return %c0_i32, %c0_i32_0 : i32, i32
  }
}

</mosaic_0001>

<llo_original>
// kernel: tpu_custom_call.1
$region0: #{tpu_custom_call.1}
  #allocation0 [shape = 'u32[]', space=smem, size = 0x4, offset = 0x4, fixed_abs, tag = 'smem constant byte address 0x4 - core index']
  #allocation1 [shape = 'u32[144,128]{1,0:T(1,128)}', space=vmem, size = 0x12000, scoped, tag = 'internal scratch']
  %s0 = inlined_call_operand.hbm [shape: f32[16,32], index: 0, kind: input, shape index: {}]
  %s1 = inlined_call_operand.hbm [shape: f32[32,96], index: 1, kind: input, shape index: {}]
  %s2 = inlined_call_operand.vmem [shape: f32[1,96], index: 2, kind: input, shape index: {}]
  %s3 = inlined_call_operand.hbm [shape: f32[32,32], index: 3, kind: input, shape index: {}]
  %s4 = inlined_call_operand.vmem [shape: f32[1,32], index: 4, kind: input, shape index: {}]
  %s5 = inlined_call_operand.hbm [shape: f32[16,32], index: 5, kind: output, shape index: {}]
  %s6 = sld [smem:[#allocation0]]
  $region42: #{tpu_custom_call.1} parent=0
    _
  %s8 = ssub.s32 1, %s6
  %s9 = scalar_select 0, %s8, %s6
  $region1: #{tpu_custom_call.1} parent=0
    #allocation2 [shape = 'u8[8192]{0}', space=vmem, size = 0x2000, scoped, tag = 'input window, operand 0, single buffered']
    #allocation3 [shape = 's32[1]{0}', space=sflag, size = 0x4, scoped, tag = 'scoped memory for tpu_custom_call.1']
    #allocation4 [shape = 's32[1]{0}', space=sflag, size = 0x4, scoped, tag = 'scoped memory for tpu_custom_call.1']
    #allocation5 [shape = 'u8[16384]{0}', space=vmem, size = 0x4000, scoped, tag = 'input window, operand 1, single buffered']
    #allocation6 [shape = 's32[1]{0}', space=sflag, size = 0x4, scoped, tag = 'scoped memory for tpu_custom_call.1']
    #allocation7 [shape = 'u8[16384]{0}', space=vmem, size = 0x4000, scoped, tag = 'input window, operand 3, single buffered']
    #allocation8 [shape = 'u8[8192]{0}', space=vmem, size = 0x2000, scoped, tag = 'output window, operand 0, single buffered']
    %10 = vsyncpa [#allocation3], 0
    %11 = vsyncpa [#allocation6], 0
    %12 = vsyncpa [#allocation4], 0
    // Predicated region
    $region2: #{tpu_custom_call.1} parent=1 // pred_check
      _
    $region3: #{tpu_custom_call.1} parent=1 // pred_check_branch
      %14 = sbr.rel (0) target = $region5
    $region4: #{tpu_custom_call.1} parent=1 // pred_region
      %s16 = ssub.s32 256, 256
      %17 = vsyncadd [#allocation3], %s16
      %s18 = sshll.u32 [#allocation2], 4
      %s19 = int_to_ptr.vmem [resolvable:$true] %s18
      %24 = dma.hbm_to_vmem [thread:$0]  %s0, 256, %s19, [#allocation3], 128, 128, 8
    $region5: #{tpu_custom_call.1} parent=1 // pred_fallthru
      _
    // Predicated region
    $region6: #{tpu_custom_call.1} parent=1 // pred_check
      _
    $region7: #{tpu_custom_call.1} parent=1 // pred_check_branch
      %26 = sbr.rel (0) target = $region9
    $region8: #{tpu_custom_call.1} parent=1 // pred_region
      %s28 = ssub.s32 512, 512
      %29 = vsyncadd [#allocation6], %s28
      %s30 = sshll.u32 [#allocation5], 4
      %s31 = int_to_ptr.vmem [resolvable:$true] %s30
      %36 = dma.hbm_to_vmem [thread:$0]  %s1, 512, %s31, [#allocation6], 128, 128, 8
    $region9: #{tpu_custom_call.1} parent=1 // pred_fallthru
      _
    // Predicated region
    $region10: #{tpu_custom_call.1} parent=1 // pred_check
      _
    $region11: #{tpu_custom_call.1} parent=1 // pred_check_branch
      %38 = sbr.rel (0) target = $region13
    $region12: #{tpu_custom_call.1} parent=1 // pred_region
      _
    $region13: #{tpu_custom_call.1} parent=1 // pred_fallthru
      _
    // Predicated region
    $region14: #{tpu_custom_call.1} parent=1 // pred_check
      _
    $region15: #{tpu_custom_call.1} parent=1 // pred_check_branch
      %40 = sbr.rel (0) target = $region17
    $region16: #{tpu_custom_call.1} parent=1 // pred_region
      %s42 = ssub.s32 512, 512
      %43 = vsyncadd [#allocation6], %s42
      %s44 = sshll.u32 [#allocation7], 4
      %s45 = int_to_ptr.vmem [resolvable:$true] %s44
      %50 = dma.hbm_to_vmem [thread:$0]  %s3, 512, %s45, [#allocation6], 128, 128, 8
    $region17: #{tpu_custom_call.1} parent=1 // pred_fallthru
      _
    // Predicated region
    $region18: #{tpu_custom_call.1} parent=1 // pred_check
      _
    $region19: #{tpu_custom_call.1} parent=1 // pred_check_branch
      %52 = sbr.rel (0) target = $region21
    $region20: #{tpu_custom_call.1} parent=1 // pred_region
      _
    $region21: #{tpu_custom_call.1} parent=1 // pred_fallthru
      _
    // Predicated region
    $region22: #{tpu_custom_call.1} parent=1 // pred_check
      _
    $region23: #{tpu_custom_call.1} parent=1 // pred_check_branch
      %54 = sbr.rel (0) target = $region25
    $region24: #{tpu_custom_call.1} parent=1 // pred_region
      %55 = dma.done [#allocation3], 256
    $region25: #{tpu_custom_call.1} parent=1 // pred_fallthru
      _
    // Predicated region
    $region26: #{tpu_custom_call.1} parent=1 // pred_check
      _
    $region27: #{tpu_custom_call.1} parent=1 // pred_check_branch
      %57 = sbr.rel (0) target = $region29
    $region28: #{tpu_custom_call.1} parent=1 // pred_region
      %58 = dma.done [#allocation6], 512
    $region29: #{tpu_custom_call.1} parent=1 // pred_fallthru
      _
    // Predicated region
    $region30: #{tpu_custom_call.1} parent=1 // pred_check
      _
    $region31: #{tpu_custom_call.1} parent=1 // pred_check_branch
      %60 = sbr.rel (0) target = $region33
    $region32: #{tpu_custom_call.1} parent=1 // pred_region
      %61 = dma.done [#allocation6], 512
    $region33: #{tpu_custom_call.1} parent=1 // pred_fallthru
      _
    %v62 = vld [vmem:[#allocation2] sm:$0xff]
    %v63 = vld [vmem:[#allocation2 + $0x8] sm:$0xff]
    %v64 = vld [vmem:[#allocation5] sm:$0xff]
    %v65 = vld [vmem:[#allocation5 + $0x8] sm:$0xff]
    %v66 = vld [vmem:[#allocation5 + $0x10] sm:$0xff]
    %v67 = vld [vmem:[#allocation5 + $0x18] sm:$0xff]
    %v68 = vld [vmem:[%s2] sm:$0x1]
    %v70 = vlaneseq
    %v71 = vshrl.u32 %v70, 7
    %v72 = vsub.s32 0, %v71
    %v73 = vrot.slane %v68, %v72
    %vm75 = vcmask 261120
    %v77 = vsel %vm75, %v62, 0
    %v80 = vsel %vm75, %v63, 0
    %82 = vmatprep.subr.mxu0 0.0
    %83 = vmatpush1.msra.mxu0 %v64
    %84 = vmatprep.subr.mxu0 0.0
    %85 = vmatpush1.msra.mxu0 %v65
    %86 = vmatprep.subr.mxu0 0.0
    %87 = vmatpush1.msra.mxu0 %v66
    %88 = vmatprep.subr.mxu0 0.0
    %89 = vmatpush1.msra.mxu0 %v67
    %90 = vmatprep.subr.mxu0 0.0
    %91 = vmatpush1.msra.mxu0 0.0
    %92 = vmatprep.subr.mxu0 0.0
    %93 = vmatpush1.msra.mxu0 0.0
    %94 = vmatprep.subr.mxu0 0.0
    %95 = vmatpush1.msra.mxu0 0.0
    %96 = vmatprep.subr.mxu0 0.0
    %97 = vmatpush1.msra.mxu0 0.0
    %98 = vmatprep.subr.mxu0 0.0
    %99 = vmatpush1.msra.mxu0 0.0
    %100 = vmatprep.subr.mxu0 0.0
    %101 = vmatpush1.msra.mxu0 0.0
    %102 = vmatprep.subr.mxu0 0.0
    %103 = vmatpush1.msra.mxu0 0.0
    %104 = vmatprep.subr.mxu0 0.0
    %105 = vmatpush1.msra.mxu0 0.0
    %106 = vmatprep.subr.mxu0 0.0
    %107 = vmatpush1.msra.mxu0 0.0
    %108 = vmatprep.subr.mxu0 0.0
    %109 = vmatpush1.msra.mxu0 0.0
    %110 = vmatprep.subr.mxu0 0.0
    %111 = vmatpush1.msra.mxu0 0.0
    %112 = vmatprep.subr.mxu0 0.0
    %113 = vmatpush1.msra.mxu0 0.0
    %114 = vmatprep.subr.mxu0 0.0
    %115 = vmatpush1.msra.mxu0 0.0
    %116 = vmatprep.subr.mxu0 0.0
    %117 = vmatpush1.msra.mxu0 0.0
    %118 = vmatprep.subr.mxu0 0.0
    %119 = vmatpush1.msra.mxu0 0.0
    %120 = vmatprep.subr.mxu0 0.0
    %121 = vmatpush1.msra.mxu0 0.0
    %122 = vmatprep.subr.mxu0 0.0
    %123 = vmatpush1.msra.mxu0 0.0
    %124 = vmatprep.subr.mxu0 0.0
    %125 = vmatpush1.msra.mxu0 0.0
    %126 = vmatprep.subr.mxu0 0.0
    %127 = vmatpush1.msra.mxu0 0.0
    %128 = vmatprep.subr.mxu0 0.0
    %129 = vmatpush1.msra.mxu0 0.0
    %130 = vmatprep.subr.mxu0 0.0
    %131 = vmatpush1.msra.mxu0 0.0
    %132 = vmatprep.subr.mxu0 0.0
    %133 = vmatpush1.msra.mxu0 0.0
    %134 = vmatprep.subr.mxu0 0.0
    %135 = vmatpush1.msra.mxu0 0.0
    %136 = vmatprep.subr.mxu0 0.0
    %137 = vmatpush1.msra.mxu0 0.0
    %138 = vmatprep.subr.mxu0 0.0
    %139 = vmatpush1.msra.mxu0 0.0
    %140 = vmatprep.subr.mxu0 0.0
    %141 = vmatpush1.msra.mxu0 0.0
    %142 = vmatprep.subr.mxu0 0.0
    %143 = vmatpush1.msra.mxu0 0.0
    %144 = vmatprep.subr.mxu0 0.0
    %145 = vmatpush1.msra.mxu0 0.0
    %146 = vmatprep.mubr.f32.mxu0 0.0
    %147 = vmatmul.mubr.f32.gmra.mrb[0].mxu0 %v77
    %v148 = vpop.f32.mrb[0].mxu0
    %v149 = vadd.f32 %v73, %v148
    %v150 = vpop.f32.mrb[0].mxu0
    %151 = vmatprep.mubr.f32.mxu0 0.0
    %152 = vmatmul.mubr.f32.gmra.mrb[0].mxu0 %v80
    %v153 = vpop.f32.mrb[0].mxu0
    %v154 = vadd.f32 %v73, %v153
    %v155 = vpop.f32.mrb[0].mxu0
    %156 = vdwg.mxu0
    %v157 = vld [vmem:[#allocation7] sm:$0xff]
    %v158 = vld [vmem:[#allocation7 + $0x8] sm:$0xff]
    %v159 = vld [vmem:[#allocation7 + $0x10] sm:$0xff]
    %v160 = vld [vmem:[#allocation7 + $0x18] sm:$0xff]
    %v161 = vld [vmem:[%s4] sm:$0x1]
    %v162 = vlaneseq
    %v163 = vshrl.u32 %v162, 7
    %v164 = vlaneseq
    %v165 = vand.u32 %v164, 127
    %vm166 = vcmp.ge.s32.totalorder %v163, %v165
    %168 = vrot.lane.b32.xlu0 %v149, 96
    %v169 = vpop.permute.xlu0 %168
    %vm170 = vcmask 64512
    %v171 = vsel %vm170, %v149, 0
    %v173 = vsel %vm170, %v169, 0
    %175 = vmatprep.subr.mxu0 0.0
    %176 = vmatpush1.xpose.msra.mxu0 %v173
    %177 = vmatprep.subr.mxu0 0.0
    %178 = vmatpush1.xpose.msra.mxu0 0.0
    %179 = vmatprep.subr.mxu0 0.0
    %180 = vmatpush1.xpose.msra.mxu0 0.0
    %181 = vmatprep.subr.mxu0 0.0
    %182 = vmatpush1.xpose.msra.mxu0 0.0
    %183 = vmatprep.subr.mxu0 0.0
    %184 = vmatpush1.xpose.msra.mxu0 0.0
    %185 = vmatprep.subr.mxu0 0.0
    %186 = vmatpush1.xpose.msra.mxu0 0.0
    %187 = vmatprep.subr.mxu0 0.0
    %188 = vmatpush1.xpose.msra.mxu0 0.0
    %189 = vmatprep.subr.mxu0 0.0
    %190 = vmatpush1.xpose.msra.mxu0 0.0
    %191 = vmatprep.subr.mxu0 0.0
    %192 = vmatpush1.xpose.msra.mxu0 0.0
    %193 = vmatprep.subr.mxu0 0.0
    %194 = vmatpush1.xpose.msra.mxu0 0.0
    %195 = vmatprep.subr.mxu0 0.0
    %196 = vmatpush1.xpose.msra.mxu0 0.0
    %197 = vmatprep.subr.mxu0 0.0
    %198 = vmatpush1.xpose.msra.mxu0 0.0
    %199 = vmatprep.subr.mxu0 0.0
    %200 = vmatpush1.xpose.msra.mxu0 0.0
    %201 = vmatprep.subr.mxu0 0.0
    %202 = vmatpush1.xpose.msra.mxu0 0.0
    %203 = vmatprep.subr.mxu0 0.0
    %204 = vmatpush1.xpose.msra.mxu0 0.0
    %205 = vmatprep.subr.mxu0 0.0
    %206 = vmatpush1.xpose.msra.mxu0 0.0
    %207 = vmatprep.subr.mxu0 0.0
    %208 = vmatpush1.xpose.msra.mxu0 0.0
    %209 = vmatprep.subr.mxu0 0.0
    %210 = vmatpush1.xpose.msra.mxu0 0.0
    %211 = vmatprep.subr.mxu0 0.0
    %212 = vmatpush1.xpose.msra.mxu0 0.0
    %213 = vmatprep.subr.mxu0 0.0
    %214 = vmatpush1.xpose.msra.mxu0 0.0
    %215 = vmatprep.subr.mxu0 0.0
    %216 = vmatpush1.xpose.msra.mxu0 0.0
    %217 = vmatprep.subr.mxu0 0.0
    %218 = vmatpush1.xpose.msra.mxu0 0.0
    %219 = vmatprep.subr.mxu0 0.0
    %220 = vmatpush1.xpose.msra.mxu0 0.0
    %221 = vmatprep.subr.mxu0 0.0
    %222 = vmatpush1.xpose.msra.mxu0 0.0
    %223 = vmatprep.subr.mxu0 0.0
    %224 = vmatpush1.xpose.msra.mxu0 0.0
    %225 = vmatprep.subr.mxu0 0.0
    %226 = vmatpush1.xpose.msra.mxu0 0.0
    %227 = vmatprep.subr.mxu0 0.0
    %228 = vmatpush1.xpose.msra.mxu0 0.0
    %229 = vmatprep.subr.mxu0 0.0
    %230 = vmatpush1.xpose.msra.mxu0 0.0
    %231 = vmatprep.subr.mxu0 0.0
    %232 = vmatpush1.xpose.msra.mxu0 0.0
    %233 = vmatprep.subr.mxu0 0.0
    %234 = vmatpush1.xpose.msra.mxu0 0.0
    %235 = vmatprep.subr.mxu0 0.0
    %236 = vmatpush1.xpose.msra.mxu0 0.0
    %237 = vmatprep.subr.mxu0 0.0
    %238 = vmatpush1.xpose.msra.mxu0 0.0
    %239 = vmatprep.mubr.f32.mxu0 0.0
    %240 = vmatmul.mubr.f32.gmra.mrb[0].mxu0 %v171
    %v241 = vpop.f32.mrb[0].mxu0
    %v242 = vadd.f32 0.0, %v241
    %v243 = vpop.f32.mrb[0].mxu0
    %244 = vdwg.mxu0
    %v245 = vsel %vm166, %v242, -inf
    %v246 = vsel %vm170, %v245, -inf
    %247 = vmax.xlane.f32.xlu0 %v246
    %v248 = vpop.xlane.xlu0 %247
    %v249 = vsub.f32 %v245, %v248
    %v250 = vmul.f32 %v249, 1.442695
    %v251 = vpow.pop %v250
    %v252 = vsel %vm170, %v251, 0.0
    %253 = vadd.xlane.f32.xlu0 %v252
    %v254 = vpop.xlane.xlu0 %253
    %v255 = vrcp.pop %v254
    %v256 = vmul.f32 %v251, %v255
    %257 = vrot.lane.b32.xlu0 %v149, 64
    %v258 = vpop.permute.xlu0 %257
    %v261 = vsel %vm170, %v256, 0
    %263 = vmatprep.subr.mxu0 0.0
    %264 = vmatpush1.msra.mxu0 %v258
    %265 = vmatprep.subr.mxu0 0.0
    %266 = vmatpush1.msra.mxu0 0.0
    %267 = vmatprep.subr.mxu0 0.0
    %268 = vmatpush1.msra.mxu0 0.0
    %269 = vmatprep.subr.mxu0 0.0
    %270 = vmatpush1.msra.mxu0 0.0
    %271 = vmatprep.subr.mxu0 0.0
    %272 = vmatpush1.msra.mxu0 0.0
    %273 = vmatprep.subr.mxu0 0.0
    %274 = vmatpush1.msra.mxu0 0.0
    %275 = vmatprep.subr.mxu0 0.0
    %276 = vmatpush1.msra.mxu0 0.0
    %277 = vmatprep.subr.mxu0 0.0
    %278 = vmatpush1.msra.mxu0 0.0
    %279 = vmatprep.subr.mxu0 0.0
    %280 = vmatpush1.msra.mxu0 0.0
    %281 = vmatprep.subr.mxu0 0.0
    %282 = vmatpush1.msra.mxu0 0.0
    %283 = vmatprep.subr.mxu0 0.0
    %284 = vmatpush1.msra.mxu0 0.0
    %285 = vmatprep.subr.mxu0 0.0
    %286 = vmatpush1.msra.mxu0 0.0
    %287 = vmatprep.subr.mxu0 0.0
    %288 = vmatpush1.msra.mxu0 0.0
    %289 = vmatprep.subr.mxu0 0.0
    %290 = vmatpush1.msra.mxu0 0.0
    %291 = vmatprep.subr.mxu0 0.0
    %292 = vmatpush1.msra.mxu0 0.0
    %293 = vmatprep.subr.mxu0 0.0
    %294 = vmatpush1.msra.mxu0 0.0
    %295 = vmatprep.subr.mxu0 0.0
    %296 = vmatpush1.msra.mxu0 0.0
    %297 = vmatprep.subr.mxu0 0.0
    %298 = vmatpush1.msra.mxu0 0.0
    %299 = vmatprep.subr.mxu0 0.0
    %300 = vmatpush1.msra.mxu0 0.0
    %301 = vmatprep.subr.mxu0 0.0
    %302 = vmatpush1.msra.mxu0 0.0
    %303 = vmatprep.subr.mxu0 0.0
    %304 = vmatpush1.msra.mxu0 0.0
    %305 = vmatprep.subr.mxu0 0.0
    %306 = vmatpush1.msra.mxu0 0.0
    %307 = vmatprep.subr.mxu0 0.0
    %308 = vmatpush1.msra.mxu0 0.0
    %309 = vmatprep.subr.mxu0 0.0
    %310 = vmatpush1.msra.mxu0 0.0
    %311 = vmatprep.subr.mxu0 0.0
    %312 = vmatpush1.msra.mxu0 0.0
    %313 = vmatprep.subr.mxu0 0.0
    %314 = vmatpush1.msra.mxu0 0.0
    %315 = vmatprep.subr.mxu0 0.0
    %316 = vmatpush1.msra.mxu0 0.0
    %317 = vmatprep.subr.mxu0 0.0
    %318 = vmatpush1.msra.mxu0 0.0
    %319 = vmatprep.subr.mxu0 0.0
    %320 = vmatpush1.msra.mxu0 0.0
    %321 = vmatprep.subr.mxu0 0.0
    %322 = vmatpush1.msra.mxu0 0.0
    %323 = vmatprep.subr.mxu0 0.0
    %324 = vmatpush1.msra.mxu0 0.0
    %325 = vmatprep.subr.mxu0 0.0
    %326 = vmatpush1.msra.mxu0 0.0
    %327 = vmatprep.mubr.f32.mxu0 0.0
    %328 = vmatmul.mubr.f32.gmra.mrb[0].mxu0 %v261
    %v329 = vpop.f32.mrb[0].mxu0
    %v330 = vadd.f32 0.0, %v329
    %v331 = vpop.f32.mrb[0].mxu0
    %332 = vdwg.mxu0
    %333 = vrot.lane.b32.xlu0 %v149, 120
    %v334 = vpop.permute.xlu0 %333
    %335 = vrot.lane.b32.xlu0 %v149, 88
    %v336 = vpop.permute.xlu0 %335
    %v337 = vsel %vm170, %v334, 0
    %v339 = vsel %vm170, %v336, 0
    %341 = vmatprep.subr.mxu0 0.0
    %342 = vmatpush1.xpose.msra.mxu0 %v339
    %343 = vmatprep.subr.mxu0 0.0
    %344 = vmatpush1.xpose.msra.mxu0 0.0
    %345 = vmatprep.subr.mxu0 0.0
    %346 = vmatpush1.xpose.msra.mxu0 0.0
    %347 = vmatprep.subr.mxu0 0.0
    %348 = vmatpush1.xpose.msra.mxu0 0.0
    %349 = vmatprep.subr.mxu0 0.0
    %350 = vmatpush1.xpose.msra.mxu0 0.0
    %351 = vmatprep.subr.mxu0 0.0
    %352 = vmatpush1.xpose.msra.mxu0 0.0
    %353 = vmatprep.subr.mxu0 0.0
    %354 = vmatpush1.xpose.msra.mxu0 0.0
    %355 = vmatprep.subr.mxu0 0.0
    %356 = vmatpush1.xpose.msra.mxu0 0.0
    %357 = vmatprep.subr.mxu0 0.0
    %358 = vmatpush1.xpose.msra.mxu0 0.0
    %359 = vmatprep.subr.mxu0 0.0
    %360 = vmatpush1.xpose.msra.mxu0 0.0
    %361 = vmatprep.subr.mxu0 0.0
    %362 = vmatpush1.xpose.msra.mxu0 0.0
    %363 = vmatprep.subr.mxu0 0.0
    %364 = vmatpush1.xpose.msra.mxu0 0.0
    %365 = vmatprep.subr.mxu0 0.0
    %366 = vmatpush1.xpose.msra.mxu0 0.0
    %367 = vmatprep.subr.mxu0 0.0
    %368 = vmatpush1.xpose.msra.mxu0 0.0
    %369 = vmatprep.subr.mxu0 0.0
    %370 = vmatpush1.xpose.msra.mxu0 0.0
    %371 = vmatprep.subr.mxu0 0.0
    %372 = vmatpush1.xpose.msra.mxu0 0.0
    %373 = vmatprep.subr.mxu0 0.0
    %374 = vmatpush1.xpose.msra.mxu0 0.0
    %375 = vmatprep.subr.mxu0 0.0
    %376 = vmatpush1.xpose.msra.mxu0 0.0
    %377 = vmatprep.subr.mxu0 0.0
    %378 = vmatpush1.xpose.msra.mxu0 0.0
    %379 = vmatprep.subr.mxu0 0.0
    %380 = vmatpush1.xpose.msra.mxu0 0.0
    %381 = vmatprep.subr.mxu0 0.0
    %382 = vmatpush1.xpose.msra.mxu0 0.0
    %383 = vmatprep.subr.mxu0 0.0
    %384 = vmatpush1.xpose.msra.mxu0 0.0
    %385 = vmatprep.subr.mxu0 0.0
    %386 = vmatpush1.xpose.msra.mxu0 0.0
    %387 = vmatprep.subr.mxu0 0.0
    %388 = vmatpush1.xpose.msra.mxu0 0.0
    %389 = vmatprep.subr.mxu0 0.0
    %390 = vmatpush1.xpose.msra.mxu0 0.0
    %391 = vmatprep.subr.mxu0 0.0
    %392 = vmatpush1.xpose.msra.mxu0 0.0
    %393 = vmatprep.subr.mxu0 0.0
    %394 = vmatpush1.xpose.msra.mxu0 0.0
    %395 = vmatprep.subr.mxu0 0.0
    %396 = vmatpush1.xpose.msra.mxu0 0.0
    %397 = vmatprep.subr.mxu0 0.0
    %398 = vmatpush1.xpose.msra.mxu0 0.0
    %399 = vmatprep.subr.mxu0 0.0
    %400 = vmatpush1.xpose.msra.mxu0 0.0
    %401 = vmatprep.subr.mxu0 0.0
    %402 = vmatpush1.xpose.msra.mxu0 0.0
    %403 = vmatprep.subr.mxu0 0.0
    %404 = vmatpush1.xpose.msra.mxu0 0.0
    %405 = vmatprep.mubr.f32.mxu0 0.0
    %406 = vmatmul.mubr.f32.gmra.mrb[0].mxu0 %v337
    %v407 = vpop.f32.mrb[0].mxu0
    %v408 = vadd.f32 0.0, %v407
    %v409 = vpop.f32.mrb[0].mxu0
    %410 = vdwg.mxu0
    %v411 = vsel %vm166, %v408, -inf
    %v412 = vsel %vm170, %v411, -inf
    %413 = vmax.xlane.f32.xlu0 %v412
    %v414 = vpop.xlane.xlu0 %413
    %v415 = vsub.f32 %v411, %v414
    %v416 = vmul.f32 %v415, 1.442695
    %v417 = vpow.pop %v416
    %v418 = vsel %vm170, %v417, 0.0
    %419 = vadd.xlane.f32.xlu0 %v418
    %v420 = vpop.xlane.xlu0 %419
    %v421 = vrcp.pop %v420
    %v422 = vmul.f32 %v417, %v421
    %423 = vrot.lane.b32.xlu0 %v149, 56
    %v424 = vpop.permute.xlu0 %423
    %v427 = vsel %vm170, %v422, 0
    %429 = vmatprep.subr.mxu0 0.0
    %430 = vmatpush1.msra.mxu0 %v424
    %431 = vmatprep.subr.mxu0 0.0
    %432 = vmatpush1.msra.mxu0 0.0
    %433 = vmatprep.subr.mxu0 0.0
    %434 = vmatpush1.msra.mxu0 0.0
    %435 = vmatprep.subr.mxu0 0.0
    %436 = vmatpush1.msra.mxu0 0.0
    %437 = vmatprep.subr.mxu0 0.0
    %438 = vmatpush1.msra.mxu0 0.0
    %439 = vmatprep.subr.mxu0 0.0
    %440 = vmatpush1.msra.mxu0 0.0
    %441 = vmatprep.subr.mxu0 0.0
    %442 = vmatpush1.msra.mxu0 0.0
    %443 = vmatprep.subr.mxu0 0.0
    %444 = vmatpush1.msra.mxu0 0.0
    %445 = vmatprep.subr.mxu0 0.0
    %446 = vmatpush1.msra.mxu0 0.0
    %447 = vmatprep.subr.mxu0 0.0
    %448 = vmatpush1.msra.mxu0 0.0
    %449 = vmatprep.subr.mxu0 0.0
    %450 = vmatpush1.msra.mxu0 0.0
    %451 = vmatprep.subr.mxu0 0.0
    %452 = vmatpush1.msra.mxu0 0.0
    %453 = vmatprep.subr.mxu0 0.0
    %454 = vmatpush1.msra.mxu0 0.0
    %455 = vmatprep.subr.mxu0 0.0
    %456 = vmatpush1.msra.mxu0 0.0
    %457 = vmatprep.subr.mxu0 0.0
    %458 = vmatpush1.msra.mxu0 0.0
    %459 = vmatprep.subr.mxu0 0.0
    %460 = vmatpush1.msra.mxu0 0.0
    %461 = vmatprep.subr.mxu0 0.0
    %462 = vmatpush1.msra.mxu0 0.0
    %463 = vmatprep.subr.mxu0 0.0
    %464 = vmatpush1.msra.mxu0 0.0
    %465 = vmatprep.subr.mxu0 0.0
    %466 = vmatpush1.msra.mxu0 0.0
    %467 = vmatprep.subr.mxu0 0.0
    %468 = vmatpush1.msra.mxu0 0.0
    %469 = vmatprep.subr.mxu0 0.0
    %470 = vmatpush1.msra.mxu0 0.0
    %471 = vmatprep.subr.mxu0 0.0
    %472 = vmatpush1.msra.mxu0 0.0
    %473 = vmatprep.subr.mxu0 0.0
    %474 = vmatpush1.msra.mxu0 0.0
    %475 = vmatprep.subr.mxu0 0.0
    %476 = vmatpush1.msra.mxu0 0.0
    %477 = vmatprep.subr.mxu0 0.0
    %478 = vmatpush1.msra.mxu0 0.0
    %479 = vmatprep.subr.mxu0 0.0
    %480 = vmatpush1.msra.mxu0 0.0
    %481 = vmatprep.subr.mxu0 0.0
    %482 = vmatpush1.msra.mxu0 0.0
    %483 = vmatprep.subr.mxu0 0.0
    %484 = vmatpush1.msra.mxu0 0.0
    %485 = vmatprep.subr.mxu0 0.0
    %486 = vmatpush1.msra.mxu0 0.0
    %487 = vmatprep.subr.mxu0 0.0
    %488 = vmatpush1.msra.mxu0 0.0
    %489 = vmatprep.subr.mxu0 0.0
    %490 = vmatpush1.msra.mxu0 0.0
    %491 = vmatprep.subr.mxu0 0.0
    %492 = vmatpush1.msra.mxu0 0.0
    %493 = vmatprep.mubr.f32.mxu0 0.0
    %494 = vmatmul.mubr.f32.gmra.mrb[0].mxu0 %v427
    %v495 = vpop.f32.mrb[0].mxu0
    %v496 = vadd.f32 0.0, %v495
    %v497 = vpop.f32.mrb[0].mxu0
    %498 = vdwg.mxu0
    %v500 = vsel %vm170, %v496, 0
    %502 = vmatprep.subr.mxu0 0.0
    %503 = vmatpush1.msra.mxu0 %v158
    %504 = vmatprep.subr.mxu0 0.0
    %505 = vmatpush1.msra.mxu0 0.0
    %506 = vmatprep.subr.mxu0 0.0
    %507 = vmatpush1.msra.mxu0 0.0
    %508 = vmatprep.subr.mxu0 0.0
    %509 = vmatpush1.msra.mxu0 0.0
    %510 = vmatprep.subr.mxu0 0.0
    %511 = vmatpush1.msra.mxu0 0.0
    %512 = vmatprep.subr.mxu0 0.0
    %513 = vmatpush1.msra.mxu0 0.0
    %514 = vmatprep.subr.mxu0 0.0
    %515 = vmatpush1.msra.mxu0 0.0
    %516 = vmatprep.subr.mxu0 0.0
    %517 = vmatpush1.msra.mxu0 0.0
    %518 = vmatprep.subr.mxu0 0.0
    %519 = vmatpush1.msra.mxu0 0.0
    %520 = vmatprep.subr.mxu0 0.0
    %521 = vmatpush1.msra.mxu0 0.0
    %522 = vmatprep.subr.mxu0 0.0
    %523 = vmatpush1.msra.mxu0 0.0
    %524 = vmatprep.subr.mxu0 0.0
    %525 = vmatpush1.msra.mxu0 0.0
    %526 = vmatprep.subr.mxu0 0.0
    %527 = vmatpush1.msra.mxu0 0.0
    %528 = vmatprep.subr.mxu0 0.0
    %529 = vmatpush1.msra.mxu0 0.0
    %530 = vmatprep.subr.mxu0 0.0
    %531 = vmatpush1.msra.mxu0 0.0
    %532 = vmatprep.subr.mxu0 0.0
    %533 = vmatpush1.msra.mxu0 0.0
    %534 = vmatprep.subr.mxu0 0.0
    %535 = vmatpush1.msra.mxu0 0.0
    %536 = vmatprep.subr.mxu0 0.0
    %537 = vmatpush1.msra.mxu0 0.0
    %538 = vmatprep.subr.mxu0 0.0
    %539 = vmatpush1.msra.mxu0 0.0
    %540 = vmatprep.subr.mxu0 0.0
    %541 = vmatpush1.msra.mxu0 0.0
    %542 = vmatprep.subr.mxu0 0.0
    %543 = vmatpush1.msra.mxu0 0.0
    %544 = vmatprep.subr.mxu0 0.0
    %545 = vmatpush1.msra.mxu0 0.0
    %546 = vmatprep.subr.mxu0 0.0
    %547 = vmatpush1.msra.mxu0 0.0
    %548 = vmatprep.subr.mxu0 0.0
    %549 = vmatpush1.msra.mxu0 0.0
    %550 = vmatprep.subr.mxu0 0.0
    %551 = vmatpush1.msra.mxu0 0.0
    %552 = vmatprep.subr.mxu0 0.0
    %553 = vmatpush1.msra.mxu0 0.0
    %554 = vmatprep.subr.mxu0 0.0
    %555 = vmatpush1.msra.mxu0 0.0
    %556 = vmatprep.subr.mxu0 0.0
    %557 = vmatpush1.msra.mxu0 0.0
    %558 = vmatprep.subr.mxu0 0.0
    %559 = vmatpush1.msra.mxu0 0.0
    %560 = vmatprep.subr.mxu0 0.0
    %561 = vmatpush1.msra.mxu0 0.0
    %562 = vmatprep.subr.mxu0 0.0
    %563 = vmatpush1.msra.mxu0 0.0
    %564 = vmatprep.subr.mxu0 0.0
    %565 = vmatpush1.msra.mxu0 0.0
    %566 = vmatprep.mubr.f32.mxu0 0.0
    %567 = vmatmul.mubr.f32.gmra.mrb[0].mxu0 %v500
    %v568 = vpop.f32.mrb[0].mxu0
    %v569 = vadd.f32 0.0, %v568
    %v570 = vpop.f32.mrb[0].mxu0
    %571 = vdwg.mxu0
    %v573 = vsel %vm170, %v330, 0
    %575 = vmatprep.subr.mxu0 0.0
    %576 = vmatpush1.msra.mxu0 %v157
    %577 = vmatprep.subr.mxu0 0.0
    %578 = vmatpush1.msra.mxu0 0.0
    %579 = vmatprep.subr.mxu0 0.0
    %580 = vmatpush1.msra.mxu0 0.0
    %581 = vmatprep.subr.mxu0 0.0
    %582 = vmatpush1.msra.mxu0 0.0
    %583 = vmatprep.subr.mxu0 0.0
    %584 = vmatpush1.msra.mxu0 0.0
    %585 = vmatprep.subr.mxu0 0.0
    %586 = vmatpush1.msra.mxu0 0.0
    %587 = vmatprep.subr.mxu0 0.0
    %588 = vmatpush1.msra.mxu0 0.0
    %589 = vmatprep.subr.mxu0 0.0
    %590 = vmatpush1.msra.mxu0 0.0
    %591 = vmatprep.subr.mxu0 0.0
    %592 = vmatpush1.msra.mxu0 0.0
    %593 = vmatprep.subr.mxu0 0.0
    %594 = vmatpush1.msra.mxu0 0.0
    %595 = vmatprep.subr.mxu0 0.0
    %596 = vmatpush1.msra.mxu0 0.0
    %597 = vmatprep.subr.mxu0 0.0
    %598 = vmatpush1.msra.mxu0 0.0
    %599 = vmatprep.subr.mxu0 0.0
    %600 = vmatpush1.msra.mxu0 0.0
    %601 = vmatprep.subr.mxu0 0.0
    %602 = vmatpush1.msra.mxu0 0.0
    %603 = vmatprep.subr.mxu0 0.0
    %604 = vmatpush1.msra.mxu0 0.0
    %605 = vmatprep.subr.mxu0 0.0
    %606 = vmatpush1.msra.mxu0 0.0
    %607 = vmatprep.subr.mxu0 0.0
    %608 = vmatpush1.msra.mxu0 0.0
    %609 = vmatprep.subr.mxu0 0.0
    %610 = vmatpush1.msra.mxu0 0.0
    %611 = vmatprep.subr.mxu0 0.0
    %612 = vmatpush1.msra.mxu0 0.0
    %613 = vmatprep.subr.mxu0 0.0
    %614 = vmatpush1.msra.mxu0 0.0
    %615 = vmatprep.subr.mxu0 0.0
    %616 = vmatpush1.msra.mxu0 0.0
    %617 = vmatprep.subr.mxu0 0.0
    %618 = vmatpush1.msra.mxu0 0.0
    %619 = vmatprep.subr.mxu0 0.0
    %620 = vmatpush1.msra.mxu0 0.0
    %621 = vmatprep.subr.mxu0 0.0
    %622 = vmatpush1.msra.mxu0 0.0
    %623 = vmatprep.subr.mxu0 0.0
    %624 = vmatpush1.msra.mxu0 0.0
    %625 = vmatprep.subr.mxu0 0.0
    %626 = vmatpush1.msra.mxu0 0.0
    %627 = vmatprep.subr.mxu0 0.0
    %628 = vmatpush1.msra.mxu0 0.0
    %629 = vmatprep.subr.mxu0 0.0
    %630 = vmatpush1.msra.mxu0 0.0
    %631 = vmatprep.subr.mxu0 0.0
    %632 = vmatpush1.msra.mxu0 0.0
    %633 = vmatprep.subr.mxu0 0.0
    %634 = vmatpush1.msra.mxu0 0.0
    %635 = vmatprep.subr.mxu0 0.0
    %636 = vmatpush1.msra.mxu0 0.0
    %637 = vmatprep.subr.mxu0 0.0
    %638 = vmatpush1.msra.mxu0 0.0
    %639 = vmatprep.mubr.f32.mxu0 0.0
    %640 = vmatmul.mubr.f32.gmra.mrb[0].mxu0 %v573
    %v641 = vpop.f32.mrb[0].mxu0
    %v642 = vadd.f32 %v569, %v641
    %v643 = vpop.f32.mrb[0].mxu0
    %644 = vdwg.mxu0
    %645 = vrot.lane.b32.xlu0 %v149, 112
    %v646 = vpop.permute.xlu0 %645
    %647 = vrot.lane.b32.xlu0 %v149, 80
    %v648 = vpop.permute.xlu0 %647
    %v649 = vsel %vm170, %v646, 0
    %v651 = vsel %vm170, %v648, 0
    %653 = vmatprep.subr.mxu0 0.0
    %654 = vmatpush1.xpose.msra.mxu0 %v651
    %655 = vmatprep.subr.mxu0 0.0
    %656 = vmatpush1.xpose.msra.mxu0 0.0
    %657 = vmatprep.subr.mxu0 0.0
    %658 = vmatpush1.xpose.msra.mxu0 0.0
    %659 = vmatprep.subr.mxu0 0.0
    %660 = vmatpush1.xpose.msra.mxu0 0.0
    %661 = vmatprep.subr.mxu0 0.0
    %662 = vmatpush1.xpose.msra.mxu0 0.0
    %663 = vmatprep.subr.mxu0 0.0
    %664 = vmatpush1.xpose.msra.mxu0 0.0
    %665 = vmatprep.subr.mxu0 0.0
    %666 = vmatpush1.xpose.msra.mxu0 0.0
    %667 = vmatprep.subr.mxu0 0.0
    %668 = vmatpush1.xpose.msra.mxu0 0.0
    %669 = vmatprep.subr.mxu0 0.0
    %670 = vmatpush1.xpose.msra.mxu0 0.0
    %671 = vmatprep.subr.mxu0 0.0
    %672 = vmatpush1.xpose.msra.mxu0 0.0
    %673 = vmatprep.subr.mxu0 0.0
    %674 = vmatpush1.xpose.msra.mxu0 0.0
    %675 = vmatprep.subr.mxu0 0.0
    %676 = vmatpush1.xpose.msra.mxu0 0.0
    %677 = vmatprep.subr.mxu0 0.0
    %678 = vmatpush1.xpose.msra.mxu0 0.0
    %679 = vmatprep.subr.mxu0 0.0
    %680 = vmatpush1.xpose.msra.mxu0 0.0
    %681 = vmatprep.subr.mxu0 0.0
    %682 = vmatpush1.xpose.msra.mxu0 0.0
    %683 = vmatprep.subr.mxu0 0.0
    %684 = vmatpush1.xpose.msra.mxu0 0.0
    %685 = vmatprep.subr.mxu0 0.0
    %686 = vmatpush1.xpose.msra.mxu0 0.0
    %687 = vmatprep.subr.mxu0 0.0
    %688 = vmatpush1.xpose.msra.mxu0 0.0
    %689 = vmatprep.subr.mxu0 0.0
    %690 = vmatpush1.xpose.msra.mxu0 0.0
    %691 = vmatprep.subr.mxu0 0.0
    %692 = vmatpush1.xpose.msra.mxu0 0.0
    %693 = vmatprep.subr.mxu0 0.0
    %694 = vmatpush1.xpose.msra.mxu0 0.0
    %695 = vmatprep.subr.mxu0 0.0
    %696 = vmatpush1.xpose.msra.mxu0 0.0
    %697 = vmatprep.subr.mxu0 0.0
    %698 = vmatpush1.xpose.msra.mxu0 0.0
    %699 = vmatprep.subr.mxu0 0.0
    %700 = vmatpush1.xpose.msra.mxu0 0.0
    %701 = vmatprep.subr.mxu0 0.0
    %702 = vmatpush1.xpose.msra.mxu0 0.0
    %703 = vmatprep.subr.mxu0 0.0
    %704 = vmatpush1.xpose.msra.mxu0 0.0
    %705 = vmatprep.subr.mxu0 0.0
    %706 = vmatpush1.xpose.msra.mxu0 0.0
    %707 = vmatprep.subr.mxu0 0.0
    %708 = vmatpush1.xpose.msra.mxu0 0.0
    %709 = vmatprep.subr.mxu0 0.0
    %710 = vmatpush1.xpose.msra.mxu0 0.0
    %711 = vmatprep.subr.mxu0 0.0
    %712 = vmatpush1.xpose.msra.mxu0 0.0
    %713 = vmatprep.subr.mxu0 0.0
    %714 = vmatpush1.xpose.msra.mxu0 0.0
    %715 = vmatprep.subr.mxu0 0.0
    %716 = vmatpush1.xpose.msra.mxu0 0.0
    %717 = vmatprep.mubr.f32.mxu0 0.0
    %718 = vmatmul.mubr.f32.gmra.mrb[0].mxu0 %v649
    %v719 = vpop.f32.mrb[0].mxu0
    %v720 = vadd.f32 0.0, %v719
    %v721 = vpop.f32.mrb[0].mxu0
    %722 = vdwg.mxu0
    %v723 = vsel %vm166, %v720, -inf
    %v724 = vsel %vm170, %v723, -inf
    %725 = vmax.xlane.f32.xlu0 %v724
    %v726 = vpop.xlane.xlu0 %725
    %v727 = vsub.f32 %v723, %v726
    %v728 = vmul.f32 %v727, 1.442695
    %v729 = vpow.pop %v728
    %v730 = vsel %vm170, %v729, 0.0
    %731 = vadd.xlane.f32.xlu0 %v730
    %v732 = vpop.xlane.xlu0 %731
    %v733 = vrcp.pop %v732
    %v734 = vmul.f32 %v729, %v733
    %735 = vrot.lane.b32.xlu0 %v149, 48
    %v736 = vpop.permute.xlu0 %735
    %v739 = vsel %vm170, %v734, 0
    %741 = vmatprep.subr.mxu0 0.0
    %742 = vmatpush1.msra.mxu0 %v736
    %743 = vmatprep.subr.mxu0 0.0
    %744 = vmatpush1.msra.mxu0 0.0
    %745 = vmatprep.subr.mxu0 0.0
    %746 = vmatpush1.msra.mxu0 0.0
    %747 = vmatprep.subr.mxu0 0.0
    %748 = vmatpush1.msra.mxu0 0.0
    %749 = vmatprep.subr.mxu0 0.0
    %750 = vmatpush1.msra.mxu0 0.0
    %751 = vmatprep.subr.mxu0 0.0
    %752 = vmatpush1.msra.mxu0 0.0
    %753 = vmatprep.subr.mxu0 0.0
    %754 = vmatpush1.msra.mxu0 0.0
    %755 = vmatprep.subr.mxu0 0.0
    %756 = vmatpush1.msra.mxu0 0.0
    %757 = vmatprep.subr.mxu0 0.0
    %758 = vmatpush1.msra.mxu0 0.0
    %759 = vmatprep.subr.mxu0 0.0
    %760 = vmatpush1.msra.mxu0 0.0
    %761 = vmatprep.subr.mxu0 0.0
    %762 = vmatpush1.msra.mxu0 0.0
    %763 = vmatprep.subr.mxu0 0.0
    %764 = vmatpush1.msra.mxu0 0.0
    %765 = vmatprep.subr.mxu0 0.0
    %766 = vmatpush1.msra.mxu0 0.0
    %767 = vmatprep.subr.mxu0 0.0
    %768 = vmatpush1.msra.mxu0 0.0
    %769 = vmatprep.subr.mxu0 0.0
    %770 = vmatpush1.msra.mxu0 0.0
    %771 = vmatprep.subr.mxu0 0.0
    %772 = vmatpush1.msra.mxu0 0.0
    %773 = vmatprep.subr.mxu0 0.0
    %774 = vmatpush1.msra.mxu0 0.0
    %775 = vmatprep.subr.mxu0 0.0
    %776 = vmatpush1.msra.mxu0 0.0
    %777 = vmatprep.subr.mxu0 0.0
    %778 = vmatpush1.msra.mxu0 0.0
    %779 = vmatprep.subr.mxu0 0.0
    %780 = vmatpush1.msra.mxu0 0.0
    %781 = vmatprep.subr.mxu0 0.0
    %782 = vmatpush1.msra.mxu0 0.0
    %783 = vmatprep.subr.mxu0 0.0
    %784 = vmatpush1.msra.mxu0 0.0
    %785 = vmatprep.subr.mxu0 0.0
    %786 = vmatpush1.msra.mxu0 0.0
    %787 = vmatprep.subr.mxu0 0.0
    %788 = vmatpush1.msra.mxu0 0.0
    %789 = vmatprep.subr.mxu0 0.0
    %790 = vmatpush1.msra.mxu0 0.0
    %791 = vmatprep.subr.mxu0 0.0
    %792 = vmatpush1.msra.mxu0 0.0
    %793 = vmatprep.subr.mxu0 0.0
    %794 = vmatpush1.msra.mxu0 0.0
    %795 = vmatprep.subr.mxu0 0.0
    %796 = vmatpush1.msra.mxu0 0.0
    %797 = vmatprep.subr.mxu0 0.0
    %798 = vmatpush1.msra.mxu0 0.0
    %799 = vmatprep.subr.mxu0 0.0
    %800 = vmatpush1.msra.mxu0 0.0
    %801 = vmatprep.subr.mxu0 0.0
    %802 = vmatpush1.msra.mxu0 0.0
    %803 = vmatprep.subr.mxu0 0.0
    %804 = vmatpush1.msra.mxu0 0.0
    %805 = vmatprep.mubr.f32.mxu0 0.0
    %806 = vmatmul.mubr.f32.gmra.mrb[0].mxu0 %v739
    %v807 = vpop.f32.mrb[0].mxu0
    %v808 = vadd.f32 0.0, %v807
    %v809 = vpop.f32.mrb[0].mxu0
    %810 = vdwg.mxu0
    %v812 = vsel %vm170, %v808, 0
    %814 = vmatprep.subr.mxu0 0.0
    %815 = vmatpush1.msra.mxu0 %v159
    %816 = vmatprep.subr.mxu0 0.0
    %817 = vmatpush1.msra.mxu0 0.0
    %818 = vmatprep.subr.mxu0 0.0
    %819 = vmatpush1.msra.mxu0 0.0
    %820 = vmatprep.subr.mxu0 0.0
    %821 = vmatpush1.msra.mxu0 0.0
    %822 = vmatprep.subr.mxu0 0.0
    %823 = vmatpush1.msra.mxu0 0.0
    %824 = vmatprep.subr.mxu0 0.0
    %825 = vmatpush1.msra.mxu0 0.0
    %826 = vmatprep.subr.mxu0 0.0
    %827 = vmatpush1.msra.mxu0 0.0
    %828 = vmatprep.subr.mxu0 0.0
    %829 = vmatpush1.msra.mxu0 0.0
    %830 = vmatprep.subr.mxu0 0.0
    %831 = vmatpush1.msra.mxu0 0.0
    %832 = vmatprep.subr.mxu0 0.0
    %833 = vmatpush1.msra.mxu0 0.0
    %834 = vmatprep.subr.mxu0 0.0
    %835 = vmatpush1.msra.mxu0 0.0
    %836 = vmatprep.subr.mxu0 0.0
    %837 = vmatpush1.msra.mxu0 0.0
    %838 = vmatprep.subr.mxu0 0.0
    %839 = vmatpush1.msra.mxu0 0.0
    %840 = vmatprep.subr.mxu0 0.0
    %841 = vmatpush1.msra.mxu0 0.0
    %842 = vmatprep.subr.mxu0 0.0
    %843 = vmatpush1.msra.mxu0 0.0
    %844 = vmatprep.subr.mxu0 0.0
    %845 = vmatpush1.msra.mxu0 0.0
    %846 = vmatprep.subr.mxu0 0.0
    %847 = vmatpush1.msra.mxu0 0.0
    %848 = vmatprep.subr.mxu0 0.0
    %849 = vmatpush1.msra.mxu0 0.0
    %850 = vmatprep.subr.mxu0 0.0
    %851 = vmatpush1.msra.mxu0 0.0
    %852 = vmatprep.subr.mxu0 0.0
    %853 = vmatpush1.msra.mxu0 0.0
    %854 = vmatprep.subr.mxu0 0.0
    %855 = vmatpush1.msra.mxu0 0.0
    %856 = vmatprep.subr.mxu0 0.0
    %857 = vmatpush1.msra.mxu0 0.0
    %858 = vmatprep.subr.mxu0 0.0
    %859 = vmatpush1.msra.mxu0 0.0
    %860 = vmatprep.subr.mxu0 0.0
    %861 = vmatpush1.msra.mxu0 0.0
    %862 = vmatprep.subr.mxu0 0.0
    %863 = vmatpush1.msra.mxu0 0.0
    %864 = vmatprep.subr.mxu0 0.0
    %865 = vmatpush1.msra.mxu0 0.0
    %866 = vmatprep.subr.mxu0 0.0
    %867 = vmatpush1.msra.mxu0 0.0
    %868 = vmatprep.subr.mxu0 0.0
    %869 = vmatpush1.msra.mxu0 0.0
    %870 = vmatprep.subr.mxu0 0.0
    %871 = vmatpush1.msra.mxu0 0.0
    %872 = vmatprep.subr.mxu0 0.0
    %873 = vmatpush1.msra.mxu0 0.0
    %874 = vmatprep.subr.mxu0 0.0
    %875 = vmatpush1.msra.mxu0 0.0
    %876 = vmatprep.subr.mxu0 0.0
    %877 = vmatpush1.msra.mxu0 0.0
    %878 = vmatprep.mubr.f32.mxu0 0.0
    %879 = vmatmul.mubr.f32.gmra.mrb[0].mxu0 %v812
    %v880 = vpop.f32.mrb[0].mxu0
    %v881 = vadd.f32 0.0, %v880
    %v882 = vpop.f32.mrb[0].mxu0
    %883 = vdwg.mxu0
    %v884 = vadd.f32 %v642, %v881
    %885 = vrot.lane.b32.xlu0 %v149, 104
    %v886 = vpop.permute.xlu0 %885
    %887 = vrot.lane.b32.xlu0 %v149, 72
    %v888 = vpop.permute.xlu0 %887
    %v889 = vsel %vm170, %v886, 0
    %v891 = vsel %vm170, %v888, 0
    %893 = vmatprep.subr.mxu0 0.0
    %894 = vmatpush1.xpose.msra.mxu0 %v891
    %895 = vmatprep.subr.mxu0 0.0
    %896 = vmatpush1.xpose.msra.mxu0 0.0
    %897 = vmatprep.subr.mxu0 0.0
    %898 = vmatpush1.xpose.msra.mxu0 0.0
    %899 = vmatprep.subr.mxu0 0.0
    %900 = vmatpush1.xpose.msra.mxu0 0.0
    %901 = vmatprep.subr.mxu0 0.0
    %902 = vmatpush1.xpose.msra.mxu0 0.0
    %903 = vmatprep.subr.mxu0 0.0
    %904 = vmatpush1.xpose.msra.mxu0 0.0
    %905 = vmatprep.subr.mxu0 0.0
    %906 = vmatpush1.xpose.msra.mxu0 0.0
    %907 = vmatprep.subr.mxu0 0.0
    %908 = vmatpush1.xpose.msra.mxu0 0.0
    %909 = vmatprep.subr.mxu0 0.0
    %910 = vmatpush1.xpose.msra.mxu0 0.0
    %911 = vmatprep.subr.mxu0 0.0
    %912 = vmatpush1.xpose.msra.mxu0 0.0
    %913 = vmatprep.subr.mxu0 0.0
    %914 = vmatpush1.xpose.msra.mxu0 0.0
    %915 = vmatprep.subr.mxu0 0.0
    %916 = vmatpush1.xpose.msra.mxu0 0.0
    %917 = vmatprep.subr.mxu0 0.0
    %918 = vmatpush1.xpose.msra.mxu0 0.0
    %919 = vmatprep.subr.mxu0 0.0
    %920 = vmatpush1.xpose.msra.mxu0 0.0
    %921 = vmatprep.subr.mxu0 0.0
    %922 = vmatpush1.xpose.msra.mxu0 0.0
    %923 = vmatprep.subr.mxu0 0.0
    %924 = vmatpush1.xpose.msra.mxu0 0.0
    %925 = vmatprep.subr.mxu0 0.0
    %926 = vmatpush1.xpose.msra.mxu0 0.0
    %927 = vmatprep.subr.mxu0 0.0
    %928 = vmatpush1.xpose.msra.mxu0 0.0
    %929 = vmatprep.subr.mxu0 0.0
    %930 = vmatpush1.xpose.msra.mxu0 0.0
    %931 = vmatprep.subr.mxu0 0.0
    %932 = vmatpush1.xpose.msra.mxu0 0.0
    %933 = vmatprep.subr.mxu0 0.0
    %934 = vmatpush1.xpose.msra.mxu0 0.0
    %935 = vmatprep.subr.mxu0 0.0
    %936 = vmatpush1.xpose.msra.mxu0 0.0
    %937 = vmatprep.subr.mxu0 0.0
    %938 = vmatpush1.xpose.msra.mxu0 0.0
    %939 = vmatprep.subr.mxu0 0.0
    %940 = vmatpush1.xpose.msra.mxu0 0.0
    %941 = vmatprep.subr.mxu0 0.0
    %942 = vmatpush1.xpose.msra.mxu0 0.0
    %943 = vmatprep.subr.mxu0 0.0
    %944 = vmatpush1.xpose.msra.mxu0 0.0
    %945 = vmatprep.subr.mxu0 0.0
    %946 = vmatpush1.xpose.msra.mxu0 0.0
    %947 = vmatprep.subr.mxu0 0.0
    %948 = vmatpush1.xpose.msra.mxu0 0.0
    %949 = vmatprep.subr.mxu0 0.0
    %950 = vmatpush1.xpose.msra.mxu0 0.0
    %951 = vmatprep.subr.mxu0 0.0
    %952 = vmatpush1.xpose.msra.mxu0 0.0
    %953 = vmatprep.subr.mxu0 0.0
    %954 = vmatpush1.xpose.msra.mxu0 0.0
    %955 = vmatprep.subr.mxu0 0.0
    %956 = vmatpush1.xpose.msra.mxu0 0.0
    %957 = vmatprep.mubr.f32.mxu0 0.0
    %958 = vmatmul.mubr.f32.gmra.mrb[0].mxu0 %v889
    %v959 = vpop.f32.mrb[0].mxu0
    %v960 = vadd.f32 0.0, %v959
    %v961 = vpop.f32.mrb[0].mxu0
    %962 = vdwg.mxu0
    %v963 = vsel %vm166, %v960, -inf
    %v964 = vsel %vm170, %v963, -inf
    %965 = vmax.xlane.f32.xlu0 %v964
    %v966 = vpop.xlane.xlu0 %965
    %v967 = vsub.f32 %v963, %v966
    %v968 = vmul.f32 %v967, 1.442695
    %v969 = vpow.pop %v968
    %v970 = vsel %vm170, %v969, 0.0
    %971 = vadd.xlane.f32.xlu0 %v970
    %v972 = vpop.xlane.xlu0 %971
    %v973 = vrcp.pop %v972
    %v974 = vmul.f32 %v969, %v973
    %975 = vrot.lane.b32.xlu0 %v149, 40
    %v976 = vpop.permute.xlu0 %975
    %v979 = vsel %vm170, %v974, 0
    %981 = vmatprep.subr.mxu0 0.0
    %982 = vmatpush1.msra.mxu0 %v976
    %983 = vmatprep.subr.mxu0 0.0
    %984 = vmatpush1.msra.mxu0 0.0
    %985 = vmatprep.subr.mxu0 0.0
    %986 = vmatpush1.msra.mxu0 0.0
    %987 = vmatprep.subr.mxu0 0.0
    %988 = vmatpush1.msra.mxu0 0.0
    %989 = vmatprep.subr.mxu0 0.0
    %990 = vmatpush1.msra.mxu0 0.0
    %991 = vmatprep.subr.mxu0 0.0
    %992 = vmatpush1.msra.mxu0 0.0
    %993 = vmatprep.subr.mxu0 0.0
    %994 = vmatpush1.msra.mxu0 0.0
    %995 = vmatprep.subr.mxu0 0.0
    %996 = vmatpush1.msra.mxu0 0.0
    %997 = vmatprep.subr.mxu0 0.0
    %998 = vmatpush1.msra.mxu0 0.0
    %999 = vmatprep.subr.mxu0 0.0
    %1000 = vmatpush1.msra.mxu0 0.0
    %1001 = vmatprep.subr.mxu0 0.0
    %1002 = vmatpush1.msra.mxu0 0.0
    %1003 = vmatprep.subr.mxu0 0.0
    %1004 = vmatpush1.msra.mxu0 0.0
    %1005 = vmatprep.subr.mxu0 0.0
    %1006 = vmatpush1.msra.mxu0 0.0
    %1007 = vmatprep.subr.mxu0 0.0
    %1008 = vmatpush1.msra.mxu0 0.0
    %1009 = vmatprep.subr.mxu0 0.0
    %1010 = vmatpush1.msra.mxu0 0.0
    %1011 = vmatprep.subr.mxu0 0.0
    %1012 = vmatpush1.msra.mxu0 0.0
    %1013 = vmatprep.subr.mxu0 0.0
    %1014 = vmatpush1.msra.mxu0 0.0
    %1015 = vmatprep.subr.mxu0 0.0
    %1016 = vmatpush1.msra.mxu0 0.0
    %1017 = vmatprep.subr.mxu0 0.0
    %1018 = vmatpush1.msra.mxu0 0.0
    %1019 = vmatprep.subr.mxu0 0.0
    %1020 = vmatpush1.msra.mxu0 0.0
    %1021 = vmatprep.subr.mxu0 0.0
    %1022 = vmatpush1.msra.mxu0 0.0
    %1023 = vmatprep.subr.mxu0 0.0
    %1024 = vmatpush1.msra.mxu0 0.0
    %1025 = vmatprep.subr.mxu0 0.0
    %1026 = vmatpush1.msra.mxu0 0.0
    %1027 = vmatprep.subr.mxu0 0.0
    %1028 = vmatpush1.msra.mxu0 0.0
    %1029 = vmatprep.subr.mxu0 0.0
    %1030 = vmatpush1.msra.mxu0 0.0
    %1031 = vmatprep.subr.mxu0 0.0
    %1032 = vmatpush1.msra.mxu0 0.0
    %1033 = vmatprep.subr.mxu0 0.0
    %1034 = vmatpush1.msra.mxu0 0.0
    %1035 = vmatprep.subr.mxu0 0.0
    %1036 = vmatpush1.msra.mxu0 0.0
    %1037 = vmatprep.subr.mxu0 0.0
    %1038 = vmatpush1.msra.mxu0 0.0
    %1039 = vmatprep.subr.mxu0 0.0
    %1040 = vmatpush1.msra.mxu0 0.0
    %1041 = vmatprep.subr.mxu0 0.0
    %1042 = vmatpush1.msra.mxu0 0.0
    %1043 = vmatprep.subr.mxu0 0.0
    %1044 = vmatpush1.msra.mxu0 0.0
    %1045 = vmatprep.mubr.f32.mxu0 0.0
    %1046 = vmatmul.mubr.f32.gmra.mrb[0].mxu0 %v979
    %v1047 = vpop.f32.mrb[0].mxu0
    %v1048 = vadd.f32 0.0, %v1047
    %v1049 = vpop.f32.mrb[0].mxu0
    %1050 = vdwg.mxu0
    %v1052 = vsel %vm170, %v1048, 0
    %1054 = vmatprep.subr.mxu0 0.0
    %1055 = vmatpush1.msra.mxu0 %v160
    %1056 = vmatprep.subr.mxu0 0.0
    %1057 = vmatpush1.msra.mxu0 0.0
    %1058 = vmatprep.subr.mxu0 0.0
    %1059 = vmatpush1.msra.mxu0 0.0
    %1060 = vmatprep.subr.mxu0 0.0
    %1061 = vmatpush1.msra.mxu0 0.0
    %1062 = vmatprep.subr.mxu0 0.0
    %1063 = vmatpush1.msra.mxu0 0.0
    %1064 = vmatprep.subr.mxu0 0.0
    %1065 = vmatpush1.msra.mxu0 0.0
    %1066 = vmatprep.subr.mxu0 0.0
    %1067 = vmatpush1.msra.mxu0 0.0
    %1068 = vmatprep.subr.mxu0 0.0
    %1069 = vmatpush1.msra.mxu0 0.0
    %1070 = vmatprep.subr.mxu0 0.0
    %1071 = vmatpush1.msra.mxu0 0.0
    %1072 = vmatprep.subr.mxu0 0.0
    %1073 = vmatpush1.msra.mxu0 0.0
    %1074 = vmatprep.subr.mxu0 0.0
    %1075 = vmatpush1.msra.mxu0 0.0
    %1076 = vmatprep.subr.mxu0 0.0
    %1077 = vmatpush1.msra.mxu0 0.0
    %1078 = vmatprep.subr.mxu0 0.0
    %1079 = vmatpush1.msra.mxu0 0.0
    %1080 = vmatprep.subr.mxu0 0.0
    %1081 = vmatpush1.msra.mxu0 0.0
    %1082 = vmatprep.subr.mxu0 0.0
    %1083 = vmatpush1.msra.mxu0 0.0
    %1084 = vmatprep.subr.mxu0 0.0
    %1085 = vmatpush1.msra.mxu0 0.0
    %1086 = vmatprep.subr.mxu0 0.0
    %1087 = vmatpush1.msra.mxu0 0.0
    %1088 = vmatprep.subr.mxu0 0.0
    %1089 = vmatpush1.msra.mxu0 0.0
    %1090 = vmatprep.subr.mxu0 0.0
    %1091 = vmatpush1.msra.mxu0 0.0
    %1092 = vmatprep.subr.mxu0 0.0
    %1093 = vmatpush1.msra.mxu0 0.0
    %1094 = vmatprep.subr.mxu0 0.0
    %1095 = vmatpush1.msra.mxu0 0.0
    %1096 = vmatprep.subr.mxu0 0.0
    %1097 = vmatpush1.msra.mxu0 0.0
    %1098 = vmatprep.subr.mxu0 0.0
    %1099 = vmatpush1.msra.mxu0 0.0
    %1100 = vmatprep.subr.mxu0 0.0
    %1101 = vmatpush1.msra.mxu0 0.0
    %1102 = vmatprep.subr.mxu0 0.0
    %1103 = vmatpush1.msra.mxu0 0.0
    %1104 = vmatprep.subr.mxu0 0.0
    %1105 = vmatpush1.msra.mxu0 0.0
    %1106 = vmatprep.subr.mxu0 0.0
    %1107 = vmatpush1.msra.mxu0 0.0
    %1108 = vmatprep.subr.mxu0 0.0
    %1109 = vmatpush1.msra.mxu0 0.0
    %1110 = vmatprep.subr.mxu0 0.0
    %1111 = vmatpush1.msra.mxu0 0.0
    %1112 = vmatprep.subr.mxu0 0.0
    %1113 = vmatpush1.msra.mxu0 0.0
    %1114 = vmatprep.subr.mxu0 0.0
    %1115 = vmatpush1.msra.mxu0 0.0
    %1116 = vmatprep.subr.mxu0 0.0
    %1117 = vmatpush1.msra.mxu0 0.0
    %1118 = vmatprep.mubr.f32.mxu0 0.0
    %1119 = vmatmul.mubr.f32.gmra.mrb[0].mxu0 %v1052
    %v1120 = vpop.f32.mrb[0].mxu0
    %v1121 = vadd.f32 0.0, %v1120
    %v1122 = vpop.f32.mrb[0].mxu0
    %1123 = vdwg.mxu0
    %v1124 = vadd.f32 %v884, %v1121
    %v1126 = vlaneseq
    %v1127 = vshrl.u32 %v1126, 7
    %v1128 = vsub.s32 0, %v1127
    %v1129 = vrot.slane %v161, %v1128
    %v1131 = vadd.f32 %v1124, %v1129
    %1132 = vst.msk [vmem:[#allocation8] sm:$0xff] %vm75, %v1131
    %1134 = vrot.lane.b32.xlu0 %v154, 96
    %v1135 = vpop.permute.xlu0 %1134
    %v1136 = vsel %vm170, %v154, 0
    %v1138 = vsel %vm170, %v1135, 0
    %1140 = vmatprep.subr.mxu0 0.0
    %1141 = vmatpush1.xpose.msra.mxu0 %v1138
    %1142 = vmatprep.subr.mxu0 0.0
    %1143 = vmatpush1.xpose.msra.mxu0 0.0
    %1144 = vmatprep.subr.mxu0 0.0
    %1145 = vmatpush1.xpose.msra.mxu0 0.0
    %1146 = vmatprep.subr.mxu0 0.0
    %1147 = vmatpush1.xpose.msra.mxu0 0.0
    %1148 = vmatprep.subr.mxu0 0.0
    %1149 = vmatpush1.xpose.msra.mxu0 0.0
    %1150 = vmatprep.subr.mxu0 0.0
    %1151 = vmatpush1.xpose.msra.mxu0 0.0
    %1152 = vmatprep.subr.mxu0 0.0
    %1153 = vmatpush1.xpose.msra.mxu0 0.0
    %1154 = vmatprep.subr.mxu0 0.0
    %1155 = vmatpush1.xpose.msra.mxu0 0.0
    %1156 = vmatprep.subr.mxu0 0.0
    %1157 = vmatpush1.xpose.msra.mxu0 0.0
    %1158 = vmatprep.subr.mxu0 0.0
    %1159 = vmatpush1.xpose.msra.mxu0 0.0
    %1160 = vmatprep.subr.mxu0 0.0
    %1161 = vmatpush1.xpose.msra.mxu0 0.0
    %1162 = vmatprep.subr.mxu0 0.0
    %1163 = vmatpush1.xpose.msra.mxu0 0.0
    %1164 = vmatprep.subr.mxu0 0.0
    %1165 = vmatpush1.xpose.msra.mxu0 0.0
    %1166 = vmatprep.subr.mxu0 0.0
    %1167 = vmatpush1.xpose.msra.mxu0 0.0
    %1168 = vmatprep.subr.mxu0 0.0
    %1169 = vmatpush1.xpose.msra.mxu0 0.0
    %1170 = vmatprep.subr.mxu0 0.0
    %1171 = vmatpush1.xpose.msra.mxu0 0.0
    %1172 = vmatprep.subr.mxu0 0.0
    %1173 = vmatpush1.xpose.msra.mxu0 0.0
    %1174 = vmatprep.subr.mxu0 0.0
    %1175 = vmatpush1.xpose.msra.mxu0 0.0
    %1176 = vmatprep.subr.mxu0 0.0
    %1177 = vmatpush1.xpose.msra.mxu0 0.0
    %1178 = vmatprep.subr.mxu0 0.0
    %1179 = vmatpush1.xpose.msra.mxu0 0.0
    %1180 = vmatprep.subr.mxu0 0.0
    %1181 = vmatpush1.xpose.msra.mxu0 0.0
    %1182 = vmatprep.subr.mxu0 0.0
    %1183 = vmatpush1.xpose.msra.mxu0 0.0
    %1184 = vmatprep.subr.mxu0 0.0
    %1185 = vmatpush1.xpose.msra.mxu0 0.0
    %1186 = vmatprep.subr.mxu0 0.0
    %1187 = vmatpush1.xpose.msra.mxu0 0.0
    %1188 = vmatprep.subr.mxu0 0.0
    %1189 = vmatpush1.xpose.msra.mxu0 0.0
    %1190 = vmatprep.subr.mxu0 0.0
    %1191 = vmatpush1.xpose.msra.mxu0 0.0
    %1192 = vmatprep.subr.mxu0 0.0
    %1193 = vmatpush1.xpose.msra.mxu0 0.0
    %1194 = vmatprep.subr.mxu0 0.0
    %1195 = vmatpush1.xpose.msra.mxu0 0.0
    %1196 = vmatprep.subr.mxu0 0.0
    %1197 = vmatpush1.xpose.msra.mxu0 0.0
    %1198 = vmatprep.subr.mxu0 0.0
    %1199 = vmatpush1.xpose.msra.mxu0 0.0
    %1200 = vmatprep.subr.mxu0 0.0
    %1201 = vmatpush1.xpose.msra.mxu0 0.0
    %1202 = vmatprep.subr.mxu0 0.0
    %1203 = vmatpush1.xpose.msra.mxu0 0.0
    %1204 = vmatprep.mubr.f32.mxu0 0.0
    %1205 = vmatmul.mubr.f32.gmra.mrb[0].mxu0 %v1136
    %v1206 = vpop.f32.mrb[0].mxu0
    %v1207 = vadd.f32 0.0, %v1206
    %v1208 = vpop.f32.mrb[0].mxu0
    %1209 = vdwg.mxu0
    %v1210 = vsel %vm166, %v1207, -inf
    %v1211 = vsel %vm170, %v1210, -inf
    %1212 = vmax.xlane.f32.xlu0 %v1211
    %v1213 = vpop.xlane.xlu0 %1212
    %v1214 = vsub.f32 %v1210, %v1213
    %v1215 = vmul.f32 %v1214, 1.442695
    %v1216 = vpow.pop %v1215
    %v1217 = vsel %vm170, %v1216, 0.0
    %1218 = vadd.xlane.f32.xlu0 %v1217
    %v1219 = vpop.xlane.xlu0 %1218
    %v1220 = vrcp.pop %v1219
    %v1221 = vmul.f32 %v1216, %v1220
    %1222 = vrot.lane.b32.xlu0 %v154, 64
    %v1223 = vpop.permute.xlu0 %1222
    %v1226 = vsel %vm170, %v1221, 0
    %1228 = vmatprep.subr.mxu0 0.0
    %1229 = vmatpush1.msra.mxu0 %v1223
    %1230 = vmatprep.subr.mxu0 0.0
    %1231 = vmatpush1.msra.mxu0 0.0
    %1232 = vmatprep.subr.mxu0 0.0
    %1233 = vmatpush1.msra.mxu0 0.0
    %1234 = vmatprep.subr.mxu0 0.0
    %1235 = vmatpush1.msra.mxu0 0.0
    %1236 = vmatprep.subr.mxu0 0.0
    %1237 = vmatpush1.msra.mxu0 0.0
    %1238 = vmatprep.subr.mxu0 0.0
    %1239 = vmatpush1.msra.mxu0 0.0
    %1240 = vmatprep.subr.mxu0 0.0
    %1241 = vmatpush1.msra.mxu0 0.0
    %1242 = vmatprep.subr.mxu0 0.0
    %1243 = vmatpush1.msra.mxu0 0.0
    %1244 = vmatprep.subr.mxu0 0.0
    %1245 = vmatpush1.msra.mxu0 0.0
    %1246 = vmatprep.subr.mxu0 0.0
    %1247 = vmatpush1.msra.mxu0 0.0
    %1248 = vmatprep.subr.mxu0 0.0
    %1249 = vmatpush1.msra.mxu0 0.0
    %1250 = vmatprep.subr.mxu0 0.0
    %1251 = vmatpush1.msra.mxu0 0.0
    %1252 = vmatprep.subr.mxu0 0.0
    %1253 = vmatpush1.msra.mxu0 0.0
    %1254 = vmatprep.subr.mxu0 0.0
    %1255 = vmatpush1.msra.mxu0 0.0
    %1256 = vmatprep.subr.mxu0 0.0
    %1257 = vmatpush1.msra.mxu0 0.0
    %1258 = vmatprep.subr.mxu0 0.0
    %1259 = vmatpush1.msra.mxu0 0.0
    %1260 = vmatprep.subr.mxu0 0.0
    %1261 = vmatpush1.msra.mxu0 0.0
    %1262 = vmatprep.subr.mxu0 0.0
    %1263 = vmatpush1.msra.mxu0 0.0
    %1264 = vmatprep.subr.mxu0 0.0
    %1265 = vmatpush1.msra.mxu0 0.0
    %1266 = vmatprep.subr.mxu0 0.0
    %1267 = vmatpush1.msra.mxu0 0.0
    %1268 = vmatprep.subr.mxu0 0.0
    %1269 = vmatpush1.msra.mxu0 0.0
    %1270 = vmatprep.subr.mxu0 0.0
    %1271 = vmatpush1.msra.mxu0 0.0
    %1272 = vmatprep.subr.mxu0 0.0
    %1273 = vmatpush1.msra.mxu0 0.0
    %1274 = vmatprep.subr.mxu0 0.0
    %1275 = vmatpush1.msra.mxu0 0.0
    %1276 = vmatprep.subr.mxu0 0.0
    %1277 = vmatpush1.msra.mxu0 0.0
    %1278 = vmatprep.subr.mxu0 0.0
    %1279 = vmatpush1.msra.mxu0 0.0
    %1280 = vmatprep.subr.mxu0 0.0
    %1281 = vmatpush1.msra.mxu0 0.0
    %1282 = vmatprep.subr.mxu0 0.0
    %1283 = vmatpush1.msra.mxu0 0.0
    %1284 = vmatprep.subr.mxu0 0.0
    %1285 = vmatpush1.msra.mxu0 0.0
    %1286 = vmatprep.subr.mxu0 0.0
    %1287 = vmatpush1.msra.mxu0 0.0
    %1288 = vmatprep.subr.mxu0 0.0
    %1289 = vmatpush1.msra.mxu0 0.0
    %1290 = vmatprep.subr.mxu0 0.0
    %1291 = vmatpush1.msra.mxu0 0.0
    %1292 = vmatprep.mubr.f32.mxu0 0.0
    %1293 = vmatmul.mubr.f32.gmra.mrb[0].mxu0 %v1226
    %v1294 = vpop.f32.mrb[0].mxu0
    %v1295 = vadd.f32 0.0, %v1294
    %v1296 = vpop.f32.mrb[0].mxu0
    %1297 = vdwg.mxu0
    %1298 = vrot.lane.b32.xlu0 %v154, 120
    %v1299 = vpop.permute.xlu0 %1298
    %1300 = vrot.lane.b32.xlu0 %v154, 88
    %v1301 = vpop.permute.xlu0 %1300
    %v1302 = vsel %vm170, %v1299, 0
    %v1304 = vsel %vm170, %v1301, 0
    %1306 = vmatprep.subr.mxu0 0.0
    %1307 = vmatpush1.xpose.msra.mxu0 %v1304
    %1308 = vmatprep.subr.mxu0 0.0
    %1309 = vmatpush1.xpose.msra.mxu0 0.0
    %1310 = vmatprep.subr.mxu0 0.0
    %1311 = vmatpush1.xpose.msra.mxu0 0.0
    %1312 = vmatprep.subr.mxu0 0.0
    %1313 = vmatpush1.xpose.msra.mxu0 0.0
    %1314 = vmatprep.subr.mxu0 0.0
    %1315 = vmatpush1.xpose.msra.mxu0 0.0
    %1316 = vmatprep.subr.mxu0 0.0
    %1317 = vmatpush1.xpose.msra.mxu0 0.0
    %1318 = vmatprep.subr.mxu0 0.0
    %1319 = vmatpush1.xpose.msra.mxu0 0.0
    %1320 = vmatprep.subr.mxu0 0.0
    %1321 = vmatpush1.xpose.msra.mxu0 0.0
    %1322 = vmatprep.subr.mxu0 0.0
    %1323 = vmatpush1.xpose.msra.mxu0 0.0
    %1324 = vmatprep.subr.mxu0 0.0
    %1325 = vmatpush1.xpose.msra.mxu0 0.0
    %1326 = vmatprep.subr.mxu0 0.0
    %1327 = vmatpush1.xpose.msra.mxu0 0.0
    %1328 = vmatprep.subr.mxu0 0.0
    %1329 = vmatpush1.xpose.msra.mxu0 0.0
    %1330 = vmatprep.subr.mxu0 0.0
    %1331 = vmatpush1.xpose.msra.mxu0 0.0
    %1332 = vmatprep.subr.mxu0 0.0
    %1333 = vmatpush1.xpose.msra.mxu0 0.0
    %1334 = vmatprep.subr.mxu0 0.0
    %1335 = vmatpush1.xpose.msra.mxu0 0.0
    %1336 = vmatprep.subr.mxu0 0.0
    %1337 = vmatpush1.xpose.msra.mxu0 0.0
    %1338 = vmatprep.subr.mxu0 0.0
    %1339 = vmatpush1.xpose.msra.mxu0 0.0
    %1340 = vmatprep.subr.mxu0 0.0
    %1341 = vmatpush1.xpose.msra.mxu0 0.0
    %1342 = vmatprep.subr.mxu0 0.0
    %1343 = vmatpush1.xpose.msra.mxu0 0.0
    %1344 = vmatprep.subr.mxu0 0.0
    %1345 = vmatpush1.xpose.msra.mxu0 0.0
    %1346 = vmatprep.subr.mxu0 0.0
    %1347 = vmatpush1.xpose.msra.mxu0 0.0
    %1348 = vmatprep.subr.mxu0 0.0
    %1349 = vmatpush1.xpose.msra.mxu0 0.0
    %1350 = vmatprep.subr.mxu0 0.0
    %1351 = vmatpush1.xpose.msra.mxu0 0.0
    %1352 = vmatprep.subr.mxu0 0.0
    %1353 = vmatpush1.xpose.msra.mxu0 0.0
    %1354 = vmatprep.subr.mxu0 0.0
    %1355 = vmatpush1.xpose.msra.mxu0 0.0
    %1356 = vmatprep.subr.mxu0 0.0
    %1357 = vmatpush1.xpose.msra.mxu0 0.0
    %1358 = vmatprep.subr.mxu0 0.0
    %1359 = vmatpush1.xpose.msra.mxu0 0.0
    %1360 = vmatprep.subr.mxu0 0.0
    %1361 = vmatpush1.xpose.msra.mxu0 0.0
    %1362 = vmatprep.subr.mxu0 0.0
    %1363 = vmatpush1.xpose.msra.mxu0 0.0
    %1364 = vmatprep.subr.mxu0 0.0
    %1365 = vmatpush1.xpose.msra.mxu0 0.0
    %1366 = vmatprep.subr.mxu0 0.0
    %1367 = vmatpush1.xpose.msra.mxu0 0.0
    %1368 = vmatprep.subr.mxu0 0.0
    %1369 = vmatpush1.xpose.msra.mxu0 0.0
    %1370 = vmatprep.mubr.f32.mxu0 0.0
    %1371 = vmatmul.mubr.f32.gmra.mrb[0].mxu0 %v1302
    %v1372 = vpop.f32.mrb[0].mxu0
    %v1373 = vadd.f32 0.0, %v1372
    %v1374 = vpop.f32.mrb[0].mxu0
    %1375 = vdwg.mxu0
    %v1376 = vsel %vm166, %v1373, -inf
    %v1377 = vsel %vm170, %v1376, -inf
    %1378 = vmax.xlane.f32.xlu0 %v1377
    %v1379 = vpop.xlane.xlu0 %1378
    %v1380 = vsub.f32 %v1376, %v1379
    %v1381 = vmul.f32 %v1380, 1.442695
    %v1382 = vpow.pop %v1381
    %v1383 = vsel %vm170, %v1382, 0.0
    %1384 = vadd.xlane.f32.xlu0 %v1383
    %v1385 = vpop.xlane.xlu0 %1384
    %v1386 = vrcp.pop %v1385
    %v1387 = vmul.f32 %v1382, %v1386
    %1388 = vrot.lane.b32.xlu0 %v154, 56
    %v1389 = vpop.permute.xlu0 %1388
    %v1392 = vsel %vm170, %v1387, 0
    %1394 = vmatprep.subr.mxu0 0.0
    %1395 = vmatpush1.msra.mxu0 %v1389
    %1396 = vmatprep.subr.mxu0 0.0
    %1397 = vmatpush1.msra.mxu0 0.0
    %1398 = vmatprep.subr.mxu0 0.0
    %1399 = vmatpush1.msra.mxu0 0.0
    %1400 = vmatprep.subr.mxu0 0.0
    %1401 = vmatpush1.msra.mxu0 0.0
    %1402 = vmatprep.subr.mxu0 0.0
    %1403 = vmatpush1.msra.mxu0 0.0
    %1404 = vmatprep.subr.mxu0 0.0
    %1405 = vmatpush1.msra.mxu0 0.0
    %1406 = vmatprep.subr.mxu0 0.0
    %1407 = vmatpush1.msra.mxu0 0.0
    %1408 = vmatprep.subr.mxu0 0.0
    %1409 = vmatpush1.msra.mxu0 0.0
    %1410 = vmatprep.subr.mxu0 0.0
    %1411 = vmatpush1.msra.mxu0 0.0
    %1412 = vmatprep.subr.mxu0 0.0
    %1413 = vmatpush1.msra.mxu0 0.0
    %1414 = vmatprep.subr.mxu0 0.0
    %1415 = vmatpush1.msra.mxu0 0.0
    %1416 = vmatprep.subr.mxu0 0.0
    %1417 = vmatpush1.msra.mxu0 0.0
    %1418 = vmatprep.subr.mxu0 0.0
    %1419 = vmatpush1.msra.mxu0 0.0
    %1420 = vmatprep.subr.mxu0 0.0
    %1421 = vmatpush1.msra.mxu0 0.0
    %1422 = vmatprep.subr.mxu0 0.0
    %1423 = vmatpush1.msra.mxu0 0.0
    %1424 = vmatprep.subr.mxu0 0.0
    %1425 = vmatpush1.msra.mxu0 0.0
    %1426 = vmatprep.subr.mxu0 0.0
    %1427 = vmatpush1.msra.mxu0 0.0
    %1428 = vmatprep.subr.mxu0 0.0
    %1429 = vmatpush1.msra.mxu0 0.0
    %1430 = vmatprep.subr.mxu0 0.0
    %1431 = vmatpush1.msra.mxu0 0.0
    %1432 = vmatprep.subr.mxu0 0.0
    %1433 = vmatpush1.msra.mxu0 0.0
    %1434 = vmatprep.subr.mxu0 0.0
    %1435 = vmatpush1.msra.mxu0 0.0
    %1436 = vmatprep.subr.mxu0 0.0
    %1437 = vmatpush1.msra.mxu0 0.0
    %1438 = vmatprep.subr.mxu0 0.0
    %1439 = vmatpush1.msra.mxu0 0.0
    %1440 = vmatprep.subr.mxu0 0.0
    %1441 = vmatpush1.msra.mxu0 0.0
    %1442 = vmatprep.subr.mxu0 0.0
    %1443 = vmatpush1.msra.mxu0 0.0
    %1444 = vmatprep.subr.mxu0 0.0
    %1445 = vmatpush1.msra.mxu0 0.0
    %1446 = vmatprep.subr.mxu0 0.0
    %1447 = vmatpush1.msra.mxu0 0.0
    %1448 = vmatprep.subr.mxu0 0.0
    %1449 = vmatpush1.msra.mxu0 0.0
    %1450 = vmatprep.subr.mxu0 0.0
    %1451 = vmatpush1.msra.mxu0 0.0
    %1452 = vmatprep.subr.mxu0 0.0
    %1453 = vmatpush1.msra.mxu0 0.0
    %1454 = vmatprep.subr.mxu0 0.0
    %1455 = vmatpush1.msra.mxu0 0.0
    %1456 = vmatprep.subr.mxu0 0.0
    %1457 = vmatpush1.msra.mxu0 0.0
    %1458 = vmatprep.mubr.f32.mxu0 0.0
    %1459 = vmatmul.mubr.f32.gmra.mrb[0].mxu0 %v1392
    %v1460 = vpop.f32.mrb[0].mxu0
    %v1461 = vadd.f32 0.0, %v1460
    %v1462 = vpop.f32.mrb[0].mxu0
    %1463 = vdwg.mxu0
    %v1465 = vsel %vm170, %v1461, 0
    %1467 = vmatprep.subr.mxu0 0.0
    %1468 = vmatpush1.msra.mxu0 %v158
    %1469 = vmatprep.subr.mxu0 0.0
    %1470 = vmatpush1.msra.mxu0 0.0
    %1471 = vmatprep.subr.mxu0 0.0
    %1472 = vmatpush1.msra.mxu0 0.0
    %1473 = vmatprep.subr.mxu0 0.0
    %1474 = vmatpush1.msra.mxu0 0.0
    %1475 = vmatprep.subr.mxu0 0.0
    %1476 = vmatpush1.msra.mxu0 0.0
    %1477 = vmatprep.subr.mxu0 0.0
    %1478 = vmatpush1.msra.mxu0 0.0
    %1479 = vmatprep.subr.mxu0 0.0
    %1480 = vmatpush1.msra.mxu0 0.0
    %1481 = vmatprep.subr.mxu0 0.0
    %1482 = vmatpush1.msra.mxu0 0.0
    %1483 = vmatprep.subr.mxu0 0.0
    %1484 = vmatpush1.msra.mxu0 0.0
    %1485 = vmatprep.subr.mxu0 0.0
    %1486 = vmatpush1.msra.mxu0 0.0
    %1487 = vmatprep.subr.mxu0 0.0
    %1488 = vmatpush1.msra.mxu0 0.0
    %1489 = vmatprep.subr.mxu0 0.0
    %1490 = vmatpush1.msra.mxu0 0.0
    %1491 = vmatprep.subr.mxu0 0.0
    %1492 = vmatpush1.msra.mxu0 0.0
    %1493 = vmatprep.subr.mxu0 0.0
    %1494 = vmatpush1.msra.mxu0 0.0
    %1495 = vmatprep.subr.mxu0 0.0
    %1496 = vmatpush1.msra.mxu0 0.0
    %1497 = vmatprep.subr.mxu0 0.0
    %1498 = vmatpush1.msra.mxu0 0.0
    %1499 = vmatprep.subr.mxu0 0.0
    %1500 = vmatpush1.msra.mxu0 0.0
    %1501 = vmatprep.subr.mxu0 0.0
    %1502 = vmatpush1.msra.mxu0 0.0
    %1503 = vmatprep.subr.mxu0 0.0
    %1504 = vmatpush1.msra.mxu0 0.0
    %1505 = vmatprep.subr.mxu0 0.0
    %1506 = vmatpush1.msra.mxu0 0.0
    %1507 = vmatprep.subr.mxu0 0.0
    %1508 = vmatpush1.msra.mxu0 0.0
    %1509 = vmatprep.subr.mxu0 0.0
    %1510 = vmatpush1.msra.mxu0 0.0
    %1511 = vmatprep.subr.mxu0 0.0
    %1512 = vmatpush1.msra.mxu0 0.0
    %1513 = vmatprep.subr.mxu0 0.0
    %1514 = vmatpush1.msra.mxu0 0.0
    %1515 = vmatprep.subr.mxu0 0.0
    %1516 = vmatpush1.msra.mxu0 0.0
    %1517 = vmatprep.subr.mxu0 0.0
    %1518 = vmatpush1.msra.mxu0 0.0
    %1519 = vmatprep.subr.mxu0 0.0
    %1520 = vmatpush1.msra.mxu0 0.0
    %1521 = vmatprep.subr.mxu0 0.0
    %1522 = vmatpush1.msra.mxu0 0.0
    %1523 = vmatprep.subr.mxu0 0.0
    %1524 = vmatpush1.msra.mxu0 0.0
    %1525 = vmatprep.subr.mxu0 0.0
    %1526 = vmatpush1.msra.mxu0 0.0
    %1527 = vmatprep.subr.mxu0 0.0
    %1528 = vmatpush1.msra.mxu0 0.0
    %1529 = vmatprep.subr.mxu0 0.0
    %1530 = vmatpush1.msra.mxu0 0.0
    %1531 = vmatprep.mubr.f32.mxu0 0.0
    %1532 = vmatmul.mubr.f32.gmra.mrb[0].mxu0 %v1465
    %v1533 = vpop.f32.mrb[0].mxu0
    %v1534 = vadd.f32 0.0, %v1533
    %v1535 = vpop.f32.mrb[0].mxu0
    %1536 = vdwg.mxu0
    %v1538 = vsel %vm170, %v1295, 0
    %1540 = vmatprep.subr.mxu0 0.0
    %1541 = vmatpush1.msra.mxu0 %v157
    %1542 = vmatprep.subr.mxu0 0.0
    %1543 = vmatpush1.msra.mxu0 0.0
    %1544 = vmatprep.subr.mxu0 0.0
    %1545 = vmatpush1.msra.mxu0 0.0
    %1546 = vmatprep.subr.mxu0 0.0
    %1547 = vmatpush1.msra.mxu0 0.0
    %1548 = vmatprep.subr.mxu0 0.0
    %1549 = vmatpush1.msra.mxu0 0.0
    %1550 = vmatprep.subr.mxu0 0.0
    %1551 = vmatpush1.msra.mxu0 0.0
    %1552 = vmatprep.subr.mxu0 0.0
    %1553 = vmatpush1.msra.mxu0 0.0
    %1554 = vmatprep.subr.mxu0 0.0
    %1555 = vmatpush1.msra.mxu0 0.0
    %1556 = vmatprep.subr.mxu0 0.0
    %1557 = vmatpush1.msra.mxu0 0.0
    %1558 = vmatprep.subr.mxu0 0.0
    %1559 = vmatpush1.msra.mxu0 0.0
    %1560 = vmatprep.subr.mxu0 0.0
    %1561 = vmatpush1.msra.mxu0 0.0
    %1562 = vmatprep.subr.mxu0 0.0
    %1563 = vmatpush1.msra.mxu0 0.0
    %1564 = vmatprep.subr.mxu0 0.0
    %1565 = vmatpush1.msra.mxu0 0.0
    %1566 = vmatprep.subr.mxu0 0.0
    %1567 = vmatpush1.msra.mxu0 0.0
    %1568 = vmatprep.subr.mxu0 0.0
    %1569 = vmatpush1.msra.mxu0 0.0
    %1570 = vmatprep.subr.mxu0 0.0
    %1571 = vmatpush1.msra.mxu0 0.0
    %1572 = vmatprep.subr.mxu0 0.0
    %1573 = vmatpush1.msra.mxu0 0.0
    %1574 = vmatprep.subr.mxu0 0.0
    %1575 = vmatpush1.msra.mxu0 0.0
    %1576 = vmatprep.subr.mxu0 0.0
    %1577 = vmatpush1.msra.mxu0 0.0
    %1578 = vmatprep.subr.mxu0 0.0
    %1579 = vmatpush1.msra.mxu0 0.0
    %1580 = vmatprep.subr.mxu0 0.0
    %1581 = vmatpush1.msra.mxu0 0.0
    %1582 = vmatprep.subr.mxu0 0.0
    %1583 = vmatpush1.msra.mxu0 0.0
    %1584 = vmatprep.subr.mxu0 0.0
    %1585 = vmatpush1.msra.mxu0 0.0
    %1586 = vmatprep.subr.mxu0 0.0
    %1587 = vmatpush1.msra.mxu0 0.0
    %1588 = vmatprep.subr.mxu0 0.0
    %1589 = vmatpush1.msra.mxu0 0.0
    %1590 = vmatprep.subr.mxu0 0.0
    %1591 = vmatpush1.msra.mxu0 0.0
    %1592 = vmatprep.subr.mxu0 0.0
    %1593 = vmatpush1.msra.mxu0 0.0
    %1594 = vmatprep.subr.mxu0 0.0
    %1595 = vmatpush1.msra.mxu0 0.0
    %1596 = vmatprep.subr.mxu0 0.0
    %1597 = vmatpush1.msra.mxu0 0.0
    %1598 = vmatprep.subr.mxu0 0.0
    %1599 = vmatpush1.msra.mxu0 0.0
    %1600 = vmatprep.subr.mxu0 0.0
    %1601 = vmatpush1.msra.mxu0 0.0
    %1602 = vmatprep.subr.mxu0 0.0
    %1603 = vmatpush1.msra.mxu0 0.0
    %1604 = vmatprep.mubr.f32.mxu0 0.0
    %1605 = vmatmul.mubr.f32.gmra.mrb[0].mxu0 %v1538
    %v1606 = vpop.f32.mrb[0].mxu0
    %v1607 = vadd.f32 %v1534, %v1606
    %v1608 = vpop.f32.mrb[0].mxu0
    %1609 = vdwg.mxu0
    %1610 = vrot.lane.b32.xlu0 %v154, 112
    %v1611 = vpop.permute.xlu0 %1610
    %1612 = vrot.lane.b32.xlu0 %v154, 80
    %v1613 = vpop.permute.xlu0 %1612
    %v1614 = vsel %vm170, %v1611, 0
    %v1616 = vsel %vm170, %v1613, 0
    %1618 = vmatprep.subr.mxu0 0.0
    %1619 = vmatpush1.xpose.msra.mxu0 %v1616
    %1620 = vmatprep.subr.mxu0 0.0
    %1621 = vmatpush1.xpose.msra.mxu0 0.0
    %1622 = vmatprep.subr.mxu0 0.0
    %1623 = vmatpush1.xpose.msra.mxu0 0.0
    %1624 = vmatprep.subr.mxu0 0.0
    %1625 = vmatpush1.xpose.msra.mxu0 0.0
    %1626 = vmatprep.subr.mxu0 0.0
    %1627 = vmatpush1.xpose.msra.mxu0 0.0
    %1628 = vmatprep.subr.mxu0 0.0
    %1629 = vmatpush1.xpose.msra.mxu0 0.0
    %1630 = vmatprep.subr.mxu0 0.0
    %1631 = vmatpush1.xpose.msra.mxu0 0.0
    %1632 = vmatprep.subr.mxu0 0.0
    %1633 = vmatpush1.xpose.msra.mxu0 0.0
    %1634 = vmatprep.subr.mxu0 0.0
    %1635 = vmatpush1.xpose.msra.mxu0 0.0
    %1636 = vmatprep.subr.mxu0 0.0
    %1637 = vmatpush1.xpose.msra.mxu0 0.0
    %1638 = vmatprep.subr.mxu0 0.0
    %1639 = vmatpush1.xpose.msra.mxu0 0.0
    %1640 = vmatprep.subr.mxu0 0.0
    %1641 = vmatpush1.xpose.msra.mxu0 0.0
    %1642 = vmatprep.subr.mxu0 0.0
    %1643 = vmatpush1.xpose.msra.mxu0 0.0
    %1644 = vmatprep.subr.mxu0 0.0
    %1645 = vmatpush1.xpose.msra.mxu0 0.0
    %1646 = vmatprep.subr.mxu0 0.0
    %1647 = vmatpush1.xpose.msra.mxu0 0.0
    %1648 = vmatprep.subr.mxu0 0.0
    %1649 = vmatpush1.xpose.msra.mxu0 0.0
    %1650 = vmatprep.subr.mxu0 0.0
    %1651 = vmatpush1.xpose.msra.mxu0 0.0
    %1652 = vmatprep.subr.mxu0 0.0
    %1653 = vmatpush1.xpose.msra.mxu0 0.0
    %1654 = vmatprep.subr.mxu0 0.0
    %1655 = vmatpush1.xpose.msra.mxu0 0.0
    %1656 = vmatprep.subr.mxu0 0.0
    %1657 = vmatpush1.xpose.msra.mxu0 0.0
    %1658 = vmatprep.subr.mxu0 0.0
    %1659 = vmatpush1.xpose.msra.mxu0 0.0
    %1660 = vmatprep.subr.mxu0 0.0
    %1661 = vmatpush1.xpose.msra.mxu0 0.0
    %1662 = vmatprep.subr.mxu0 0.0
    %1663 = vmatpush1.xpose.msra.mxu0 0.0
    %1664 = vmatprep.subr.mxu0 0.0
    %1665 = vmatpush1.xpose.msra.mxu0 0.0
    %1666 = vmatprep.subr.mxu0 0.0
    %1667 = vmatpush1.xpose.msra.mxu0 0.0
    %1668 = vmatprep.subr.mxu0 0.0
    %1669 = vmatpush1.xpose.msra.mxu0 0.0
    %1670 = vmatprep.subr.mxu0 0.0
    %1671 = vmatpush1.xpose.msra.mxu0 0.0
    %1672 = vmatprep.subr.mxu0 0.0
    %1673 = vmatpush1.xpose.msra.mxu0 0.0
    %1674 = vmatprep.subr.mxu0 0.0
    %1675 = vmatpush1.xpose.msra.mxu0 0.0
    %1676 = vmatprep.subr.mxu0 0.0
    %1677 = vmatpush1.xpose.msra.mxu0 0.0
    %1678 = vmatprep.subr.mxu0 0.0
    %1679 = vmatpush1.xpose.msra.mxu0 0.0
    %1680 = vmatprep.subr.mxu0 0.0
    %1681 = vmatpush1.xpose.msra.mxu0 0.0
    %1682 = vmatprep.mubr.f32.mxu0 0.0
    %1683 = vmatmul.mubr.f32.gmra.mrb[0].mxu0 %v1614
    %v1684 = vpop.f32.mrb[0].mxu0
    %v1685 = vadd.f32 0.0, %v1684
    %v1686 = vpop.f32.mrb[0].mxu0
    %1687 = vdwg.mxu0
    %v1688 = vsel %vm166, %v1685, -inf
    %v1689 = vsel %vm170, %v1688, -inf
    %1690 = vmax.xlane.f32.xlu0 %v1689
    %v1691 = vpop.xlane.xlu0 %1690
    %v1692 = vsub.f32 %v1688, %v1691
    %v1693 = vmul.f32 %v1692, 1.442695
    %v1694 = vpow.pop %v1693
    %v1695 = vsel %vm170, %v1694, 0.0
    %1696 = vadd.xlane.f32.xlu0 %v1695
    %v1697 = vpop.xlane.xlu0 %1696
    %v1698 = vrcp.pop %v1697
    %v1699 = vmul.f32 %v1694, %v1698
    %1700 = vrot.lane.b32.xlu0 %v154, 48
    %v1701 = vpop.permute.xlu0 %1700
    %v1704 = vsel %vm170, %v1699, 0
    %1706 = vmatprep.subr.mxu0 0.0
    %1707 = vmatpush1.msra.mxu0 %v1701
    %1708 = vmatprep.subr.mxu0 0.0
    %1709 = vmatpush1.msra.mxu0 0.0
    %1710 = vmatprep.subr.mxu0 0.0
    %1711 = vmatpush1.msra.mxu0 0.0
    %1712 = vmatprep.subr.mxu0 0.0
    %1713 = vmatpush1.msra.mxu0 0.0
    %1714 = vmatprep.subr.mxu0 0.0
    %1715 = vmatpush1.msra.mxu0 0.0
    %1716 = vmatprep.subr.mxu0 0.0
    %1717 = vmatpush1.msra.mxu0 0.0
    %1718 = vmatprep.subr.mxu0 0.0
    %1719 = vmatpush1.msra.mxu0 0.0
    %1720 = vmatprep.subr.mxu0 0.0
    %1721 = vmatpush1.msra.mxu0 0.0
    %1722 = vmatprep.subr.mxu0 0.0
    %1723 = vmatpush1.msra.mxu0 0.0
    %1724 = vmatprep.subr.mxu0 0.0
    %1725 = vmatpush1.msra.mxu0 0.0
    %1726 = vmatprep.subr.mxu0 0.0
    %1727 = vmatpush1.msra.mxu0 0.0
    %1728 = vmatprep.subr.mxu0 0.0
    %1729 = vmatpush1.msra.mxu0 0.0
    %1730 = vmatprep.subr.mxu0 0.0
    %1731 = vmatpush1.msra.mxu0 0.0
    %1732 = vmatprep.subr.mxu0 0.0
    %1733 = vmatpush1.msra.mxu0 0.0
    %1734 = vmatprep.subr.mxu0 0.0
    %1735 = vmatpush1.msra.mxu0 0.0
    %1736 = vmatprep.subr.mxu0 0.0
    %1737 = vmatpush1.msra.mxu0 0.0
    %1738 = vmatprep.subr.mxu0 0.0
    %1739 = vmatpush1.msra.mxu0 0.0
    %1740 = vmatprep.subr.mxu0 0.0
    %1741 = vmatpush1.msra.mxu0 0.0
    %1742 = vmatprep.subr.mxu0 0.0
    %1743 = vmatpush1.msra.mxu0 0.0
    %1744 = vmatprep.subr.mxu0 0.0
    %1745 = vmatpush1.msra.mxu0 0.0
    %1746 = vmatprep.subr.mxu0 0.0
    %1747 = vmatpush1.msra.mxu0 0.0
    %1748 = vmatprep.subr.mxu0 0.0
    %1749 = vmatpush1.msra.mxu0 0.0
    %1750 = vmatprep.subr.mxu0 0.0
    %1751 = vmatpush1.msra.mxu0 0.0
    %1752 = vmatprep.subr.mxu0 0.0
    %1753 = vmatpush1.msra.mxu0 0.0
    %1754 = vmatprep.subr.mxu0 0.0
    %1755 = vmatpush1.msra.mxu0 0.0
    %1756 = vmatprep.subr.mxu0 0.0
    %1757 = vmatpush1.msra.mxu0 0.0
    %1758 = vmatprep.subr.mxu0 0.0
    %1759 = vmatpush1.msra.mxu0 0.0
    %1760 = vmatprep.subr.mxu0 0.0
    %1761 = vmatpush1.msra.mxu0 0.0
    %1762 = vmatprep.subr.mxu0 0.0
    %1763 = vmatpush1.msra.mxu0 0.0
    %1764 = vmatprep.subr.mxu0 0.0
    %1765 = vmatpush1.msra.mxu0 0.0
    %1766 = vmatprep.subr.mxu0 0.0
    %1767 = vmatpush1.msra.mxu0 0.0
    %1768 = vmatprep.subr.mxu0 0.0
    %1769 = vmatpush1.msra.mxu0 0.0
    %1770 = vmatprep.mubr.f32.mxu0 0.0
    %1771 = vmatmul.mubr.f32.gmra.mrb[0].mxu0 %v1704
    %v1772 = vpop.f32.mrb[0].mxu0
    %v1773 = vadd.f32 0.0, %v1772
    %v1774 = vpop.f32.mrb[0].mxu0
    %1775 = vdwg.mxu0
    %v1777 = vsel %vm170, %v1773, 0
    %1779 = vmatprep.subr.mxu0 0.0
    %1780 = vmatpush1.msra.mxu0 %v159
    %1781 = vmatprep.subr.mxu0 0.0
    %1782 = vmatpush1.msra.mxu0 0.0
    %1783 = vmatprep.subr.mxu0 0.0
    %1784 = vmatpush1.msra.mxu0 0.0
    %1785 = vmatprep.subr.mxu0 0.0
    %1786 = vmatpush1.msra.mxu0 0.0
    %1787 = vmatprep.subr.mxu0 0.0
    %1788 = vmatpush1.msra.mxu0 0.0
    %1789 = vmatprep.subr.mxu0 0.0
    %1790 = vmatpush1.msra.mxu0 0.0
    %1791 = vmatprep.subr.mxu0 0.0
    %1792 = vmatpush1.msra.mxu0 0.0
    %1793 = vmatprep.subr.mxu0 0.0
    %1794 = vmatpush1.msra.mxu0 0.0
    %1795 = vmatprep.subr.mxu0 0.0
    %1796 = vmatpush1.msra.mxu0 0.0
    %1797 = vmatprep.subr.mxu0 0.0
    %1798 = vmatpush1.msra.mxu0 0.0
    %1799 = vmatprep.subr.mxu0 0.0
    %1800 = vmatpush1.msra.mxu0 0.0
    %1801 = vmatprep.subr.mxu0 0.0
    %1802 = vmatpush1.msra.mxu0 0.0
    %1803 = vmatprep.subr.mxu0 0.0
    %1804 = vmatpush1.msra.mxu0 0.0
    %1805 = vmatprep.subr.mxu0 0.0
    %1806 = vmatpush1.msra.mxu0 0.0
    %1807 = vmatprep.subr.mxu0 0.0
    %1808 = vmatpush1.msra.mxu0 0.0
    %1809 = vmatprep.subr.mxu0 0.0
    %1810 = vmatpush1.msra.mxu0 0.0
    %1811 = vmatprep.subr.mxu0 0.0
    %1812 = vmatpush1.msra.mxu0 0.0
    %1813 = vmatprep.subr.mxu0 0.0
    %1814 = vmatpush1.msra.mxu0 0.0
    %1815 = vmatprep.subr.mxu0 0.0
    %1816 = vmatpush1.msra.mxu0 0.0
    %1817 = vmatprep.subr.mxu0 0.0
    %1818 = vmatpush1.msra.mxu0 0.0
    %1819 = vmatprep.subr.mxu0 0.0
    %1820 = vmatpush1.msra.mxu0 0.0
    %1821 = vmatprep.subr.mxu0 0.0
    %1822 = vmatpush1.msra.mxu0 0.0
    %1823 = vmatprep.subr.mxu0 0.0
    %1824 = vmatpush1.msra.mxu0 0.0
    %1825 = vmatprep.subr.mxu0 0.0
    %1826 = vmatpush1.msra.mxu0 0.0
    %1827 = vmatprep.subr.mxu0 0.0
    %1828 = vmatpush1.msra.mxu0 0.0
    %1829 = vmatprep.subr.mxu0 0.0
    %1830 = vmatpush1.msra.mxu0 0.0
    %1831 = vmatprep.subr.mxu0 0.0
    %1832 = vmatpush1.msra.mxu0 0.0
    %1833 = vmatprep.subr.mxu0 0.0
    %1834 = vmatpush1.msra.mxu0 0.0
    %1835 = vmatprep.subr.mxu0 0.0
    %1836 = vmatpush1.msra.mxu0 0.0
    %1837 = vmatprep.subr.mxu0 0.0
    %1838 = vmatpush1.msra.mxu0 0.0
    %1839 = vmatprep.subr.mxu0 0.0
    %1840 = vmatpush1.msra.mxu0 0.0
    %1841 = vmatprep.subr.mxu0 0.0
    %1842 = vmatpush1.msra.mxu0 0.0
    %1843 = vmatprep.mubr.f32.mxu0 0.0
    %1844 = vmatmul.mubr.f32.gmra.mrb[0].mxu0 %v1777
    %v1845 = vpop.f32.mrb[0].mxu0
    %v1846 = vadd.f32 0.0, %v1845
    %v1847 = vpop.f32.mrb[0].mxu0
    %1848 = vdwg.mxu0
    %v1849 = vadd.f32 %v1607, %v1846
    %1850 = vrot.lane.b32.xlu0 %v154, 104
    %v1851 = vpop.permute.xlu0 %1850
    %1852 = vrot.lane.b32.xlu0 %v154, 72
    %v1853 = vpop.permute.xlu0 %1852
    %v1854 = vsel %vm170, %v1851, 0
    %v1856 = vsel %vm170, %v1853, 0
    %1858 = vmatprep.subr.mxu0 0.0
    %1859 = vmatpush1.xpose.msra.mxu0 %v1856
    %1860 = vmatprep.subr.mxu0 0.0
    %1861 = vmatpush1.xpose.msra.mxu0 0.0
    %1862 = vmatprep.subr.mxu0 0.0
    %1863 = vmatpush1.xpose.msra.mxu0 0.0
    %1864 = vmatprep.subr.mxu0 0.0
    %1865 = vmatpush1.xpose.msra.mxu0 0.0
    %1866 = vmatprep.subr.mxu0 0.0
    %1867 = vmatpush1.xpose.msra.mxu0 0.0
    %1868 = vmatprep.subr.mxu0 0.0
    %1869 = vmatpush1.xpose.msra.mxu0 0.0
    %1870 = vmatprep.subr.mxu0 0.0
    %1871 = vmatpush1.xpose.msra.mxu0 0.0
    %1872 = vmatprep.subr.mxu0 0.0
    %1873 = vmatpush1.xpose.msra.mxu0 0.0
    %1874 = vmatprep.subr.mxu0 0.0
    %1875 = vmatpush1.xpose.msra.mxu0 0.0
    %1876 = vmatprep.subr.mxu0 0.0
    %1877 = vmatpush1.xpose.msra.mxu0 0.0
    %1878 = vmatprep.subr.mxu0 0.0
    %1879 = vmatpush1.xpose.msra.mxu0 0.0
    %1880 = vmatprep.subr.mxu0 0.0
    %1881 = vmatpush1.xpose.msra.mxu0 0.0
    %1882 = vmatprep.subr.mxu0 0.0
    %1883 = vmatpush1.xpose.msra.mxu0 0.0
    %1884 = vmatprep.subr.mxu0 0.0
    %1885 = vmatpush1.xpose.msra.mxu0 0.0
    %1886 = vmatprep.subr.mxu0 0.0
    %1887 = vmatpush1.xpose.msra.mxu0 0.0
    %1888 = vmatprep.subr.mxu0 0.0
    %1889 = vmatpush1.xpose.msra.mxu0 0.0
    %1890 = vmatprep.subr.mxu0 0.0
    %1891 = vmatpush1.xpose.msra.mxu0 0.0
    %1892 = vmatprep.subr.mxu0 0.0
    %1893 = vmatpush1.xpose.msra.mxu0 0.0
    %1894 = vmatprep.subr.mxu0 0.0
    %1895 = vmatpush1.xpose.msra.mxu0 0.0
    %1896 = vmatprep.subr.mxu0 0.0
    %1897 = vmatpush1.xpose.msra.mxu0 0.0
    %1898 = vmatprep.subr.mxu0 0.0
    %1899 = vmatpush1.xpose.msra.mxu0 0.0
    %1900 = vmatprep.subr.mxu0 0.0
    %1901 = vmatpush1.xpose.msra.mxu0 0.0
    %1902 = vmatprep.subr.mxu0 0.0
    %1903 = vmatpush1.xpose.msra.mxu0 0.0
    %1904 = vmatprep.subr.mxu0 0.0
    %1905 = vmatpush1.xpose.msra.mxu0 0.0
    %1906 = vmatprep.subr.mxu0 0.0
    %1907 = vmatpush1.xpose.msra.mxu0 0.0
    %1908 = vmatprep.subr.mxu0 0.0
    %1909 = vmatpush1.xpose.msra.mxu0 0.0
    %1910 = vmatprep.subr.mxu0 0.0
    %1911 = vmatpush1.xpose.msra.mxu0 0.0
    %1912 = vmatprep.subr.mxu0 0.0
    %1913 = vmatpush1.xpose.msra.mxu0 0.0
    %1914 = vmatprep.subr.mxu0 0.0
    %1915 = vmatpush1.xpose.msra.mxu0 0.0
    %1916 = vmatprep.subr.mxu0 0.0
    %1917 = vmatpush1.xpose.msra.mxu0 0.0
    %1918 = vmatprep.subr.mxu0 0.0
    %1919 = vmatpush1.xpose.msra.mxu0 0.0
    %1920 = vmatprep.subr.mxu0 0.0
    %1921 = vmatpush1.xpose.msra.mxu0 0.0
    %1922 = vmatprep.mubr.f32.mxu0 0.0
    %1923 = vmatmul.mubr.f32.gmra.mrb[0].mxu0 %v1854
    %v1924 = vpop.f32.mrb[0].mxu0
    %v1925 = vadd.f32 0.0, %v1924
    %v1926 = vpop.f32.mrb[0].mxu0
    %1927 = vdwg.mxu0
    %v1928 = vsel %vm166, %v1925, -inf
    %v1929 = vsel %vm170, %v1928, -inf
    %1930 = vmax.xlane.f32.xlu0 %v1929
    %v1931 = vpop.xlane.xlu0 %1930
    %v1932 = vsub.f32 %v1928, %v1931
    %v1933 = vmul.f32 %v1932, 1.442695
    %v1934 = vpow.pop %v1933
    %v1935 = vsel %vm170, %v1934, 0.0
    %1936 = vadd.xlane.f32.xlu0 %v1935
    %v1937 = vpop.xlane.xlu0 %1936
    %v1938 = vrcp.pop %v1937
    %v1939 = vmul.f32 %v1934, %v1938
    %1940 = vrot.lane.b32.xlu0 %v154, 40
    %v1941 = vpop.permute.xlu0 %1940
    %v1944 = vsel %vm170, %v1939, 0
    %1946 = vmatprep.subr.mxu0 0.0
    %1947 = vmatpush1.msra.mxu0 %v1941
    %1948 = vmatprep.subr.mxu0 0.0
    %1949 = vmatpush1.msra.mxu0 0.0
    %1950 = vmatprep.subr.mxu0 0.0
    %1951 = vmatpush1.msra.mxu0 0.0
    %1952 = vmatprep.subr.mxu0 0.0
    %1953 = vmatpush1.msra.mxu0 0.0
    %1954 = vmatprep.subr.mxu0 0.0
    %1955 = vmatpush1.msra.mxu0 0.0
    %1956 = vmatprep.subr.mxu0 0.0
    %1957 = vmatpush1.msra.mxu0 0.0
    %1958 = vmatprep.subr.mxu0 0.0
    %1959 = vmatpush1.msra.mxu0 0.0
    %1960 = vmatprep.subr.mxu0 0.0
    %1961 = vmatpush1.msra.mxu0 0.0
    %1962 = vmatprep.subr.mxu0 0.0
    %1963 = vmatpush1.msra.mxu0 0.0
    %1964 = vmatprep.subr.mxu0 0.0
    %1965 = vmatpush1.msra.mxu0 0.0
    %1966 = vmatprep.subr.mxu0 0.0
    %1967 = vmatpush1.msra.mxu0 0.0
    %1968 = vmatprep.subr.mxu0 0.0
    %1969 = vmatpush1.msra.mxu0 0.0
    %1970 = vmatprep.subr.mxu0 0.0
    %1971 = vmatpush1.msra.mxu0 0.0
    %1972 = vmatprep.subr.mxu0 0.0
    %1973 = vmatpush1.msra.mxu0 0.0
    %1974 = vmatprep.subr.mxu0 0.0
    %1975 = vmatpush1.msra.mxu0 0.0
    %1976 = vmatprep.subr.mxu0 0.0
    %1977 = vmatpush1.msra.mxu0 0.0
    %1978 = vmatprep.subr.mxu0 0.0
    %1979 = vmatpush1.msra.mxu0 0.0
    %1980 = vmatprep.subr.mxu0 0.0
    %1981 = vmatpush1.msra.mxu0 0.0
    %1982 = vmatprep.subr.mxu0 0.0
    %1983 = vmatpush1.msra.mxu0 0.0
    %1984 = vmatprep.subr.mxu0 0.0
    %1985 = vmatpush1.msra.mxu0 0.0
    %1986 = vmatprep.subr.mxu0 0.0
    %1987 = vmatpush1.msra.mxu0 0.0
    %1988 = vmatprep.subr.mxu0 0.0
    %1989 = vmatpush1.msra.mxu0 0.0
    %1990 = vmatprep.subr.mxu0 0.0
    %1991 = vmatpush1.msra.mxu0 0.0
    %1992 = vmatprep.subr.mxu0 0.0
    %1993 = vmatpush1.msra.mxu0 0.0
    %1994 = vmatprep.subr.mxu0 0.0
    %1995 = vmatpush1.msra.mxu0 0.0
    %1996 = vmatprep.subr.mxu0 0.0
    %1997 = vmatpush1.msra.mxu0 0.0
    %1998 = vmatprep.subr.mxu0 0.0
    %1999 = vmatpush1.msra.mxu0 0.0
    %2000 = vmatprep.subr.mxu0 0.0
    %2001 = vmatpush1.msra.mxu0 0.0
    %2002 = vmatprep.subr.mxu0 0.0
    %2003 = vmatpush1.msra.mxu0 0.0
    %2004 = vmatprep.subr.mxu0 0.0
    %2005 = vmatpush1.msra.mxu0 0.0
    %2006 = vmatprep.subr.mxu0 0.0
    %2007 = vmatpush1.msra.mxu0 0.0
    %2008 = vmatprep.subr.mxu0 0.0
    %2009 = vmatpush1.msra.mxu0 0.0
    %2010 = vmatprep.mubr.f32.mxu0 0.0
    %2011 = vmatmul.mubr.f32.gmra.mrb[0].mxu0 %v1944
    %v2012 = vpop.f32.mrb[0].mxu0
    %v2013 = vadd.f32 0.0, %v2012
    %v2014 = vpop.f32.mrb[0].mxu0
    %2015 = vdwg.mxu0
    %v2017 = vsel %vm170, %v2013, 0
    %2019 = vmatprep.subr.mxu0 0.0
    %2020 = vmatpush1.msra.mxu0 %v160
    %2021 = vmatprep.subr.mxu0 0.0
    %2022 = vmatpush1.msra.mxu0 0.0
    %2023 = vmatprep.subr.mxu0 0.0
    %2024 = vmatpush1.msra.mxu0 0.0
    %2025 = vmatprep.subr.mxu0 0.0
    %2026 = vmatpush1.msra.mxu0 0.0
    %2027 = vmatprep.subr.mxu0 0.0
    %2028 = vmatpush1.msra.mxu0 0.0
    %2029 = vmatprep.subr.mxu0 0.0
    %2030 = vmatpush1.msra.mxu0 0.0
    %2031 = vmatprep.subr.mxu0 0.0
    %2032 = vmatpush1.msra.mxu0 0.0
    %2033 = vmatprep.subr.mxu0 0.0
    %2034 = vmatpush1.msra.mxu0 0.0
    %2035 = vmatprep.subr.mxu0 0.0
    %2036 = vmatpush1.msra.mxu0 0.0
    %2037 = vmatprep.subr.mxu0 0.0
    %2038 = vmatpush1.msra.mxu0 0.0
    %2039 = vmatprep.subr.mxu0 0.0
    %2040 = vmatpush1.msra.mxu0 0.0
    %2041 = vmatprep.subr.mxu0 0.0
    %2042 = vmatpush1.msra.mxu0 0.0
    %2043 = vmatprep.subr.mxu0 0.0
    %2044 = vmatpush1.msra.mxu0 0.0
    %2045 = vmatprep.subr.mxu0 0.0
    %2046 = vmatpush1.msra.mxu0 0.0
    %2047 = vmatprep.subr.mxu0 0.0
    %2048 = vmatpush1.msra.mxu0 0.0
    %2049 = vmatprep.subr.mxu0 0.0
    %2050 = vmatpush1.msra.mxu0 0.0
    %2051 = vmatprep.subr.mxu0 0.0
    %2052 = vmatpush1.msra.mxu0 0.0
    %2053 = vmatprep.subr.mxu0 0.0
    %2054 = vmatpush1.msra.mxu0 0.0
    %2055 = vmatprep.subr.mxu0 0.0
    %2056 = vmatpush1.msra.mxu0 0.0
    %2057 = vmatprep.subr.mxu0 0.0
    %2058 = vmatpush1.msra.mxu0 0.0
    %2059 = vmatprep.subr.mxu0 0.0
    %2060 = vmatpush1.msra.mxu0 0.0
    %2061 = vmatprep.subr.mxu0 0.0
    %2062 = vmatpush1.msra.mxu0 0.0
    %2063 = vmatprep.subr.mxu0 0.0
    %2064 = vmatpush1.msra.mxu0 0.0
    %2065 = vmatprep.subr.mxu0 0.0
    %2066 = vmatpush1.msra.mxu0 0.0
    %2067 = vmatprep.subr.mxu0 0.0
    %2068 = vmatpush1.msra.mxu0 0.0
    %2069 = vmatprep.subr.mxu0 0.0
    %2070 = vmatpush1.msra.mxu0 0.0
    %2071 = vmatprep.subr.mxu0 0.0
    %2072 = vmatpush1.msra.mxu0 0.0
    %2073 = vmatprep.subr.mxu0 0.0
    %2074 = vmatpush1.msra.mxu0 0.0
    %2075 = vmatprep.subr.mxu0 0.0
    %2076 = vmatpush1.msra.mxu0 0.0
    %2077 = vmatprep.subr.mxu0 0.0
    %2078 = vmatpush1.msra.mxu0 0.0
    %2079 = vmatprep.subr.mxu0 0.0
    %2080 = vmatpush1.msra.mxu0 0.0
    %2081 = vmatprep.subr.mxu0 0.0
    %2082 = vmatpush1.msra.mxu0 0.0
    %2083 = vmatprep.mubr.f32.mxu0 0.0
    %2084 = vmatmul.mubr.f32.gmra.mrb[0].mxu0 %v2017
    %v2085 = vpop.f32.mrb[0].mxu0
    %v2086 = vadd.f32 0.0, %v2085
    %v2087 = vpop.f32.mrb[0].mxu0
    %2088 = vdwg.mxu0
    %v2089 = vadd.f32 %v1849, %v2086
    %v2090 = vadd.f32 %v2089, %v1129
    %2091 = vst.msk [vmem:[#allocation8 + $0x8] sm:$0xff] %vm75, %v2090
    // Predicated region
    $region34: #{tpu_custom_call.1} parent=1 // pred_check
      _
    $region35: #{tpu_custom_call.1} parent=1 // pred_check_branch
      %2093 = sbr.rel (0) target = $region37
    $region36: #{tpu_custom_call.1} parent=1 // pred_region
      %s2095 = ssub.s32 256, 256
      %2096 = vsyncadd [#allocation4], %s2095
      %s2097 = sshll.u32 [#allocation8], 4
      %s2098 = int_to_ptr.vmem [resolvable:$true] %s2097
      %2103 = dma.vmem_to_hbm [thread:$0]  %s2098, 256, %s5, [#allocation4], 128, 128, 8
    $region37: #{tpu_custom_call.1} parent=1 // pred_fallthru
      _
    // Predicated region
    $region38: #{tpu_custom_call.1} parent=1 // pred_check
      _
    $region39: #{tpu_custom_call.1} parent=1 // pred_check_branch
      %2105 = sbr.rel (0) target = $region41
    $region40: #{tpu_custom_call.1} parent=1 // pred_region
      %2106 = dma.done [#allocation4], 256
    $region41: #{tpu_custom_call.1} parent=1 // pred_fallthru
      _
    %2107 = vsyncpa [#allocation3], 1
    %2108 = vsyncpa [#allocation6], 1
    %2109 = vsyncpa [#allocation4], 1

</llo_original>
